<compile_context>
chip_gen: v5e
topology: v5e:2x2
jax: 0.10.0
libtpu: 0.0.40
codegen_flags: <defaults>
</compile_context>

<pallas_src>
import functools

import jax
import jax.numpy as jnp
from jax.experimental import pallas as pl
from jax.experimental.pallas import tpu as pltpu

IMG = 16          # the hard-coded 16x16 in the torch module
Q = IMG * IMG     # 256


def _tnet_sv_kernel(at_ref, svs_ref, z_ref, out_ref, m_ref, *, c2t, p):
    # at_ref : (Q, nvec)        A^T, constant index map -> resident in VMEM
    # svs_ref: (C2T, nvec, P)   svecs rows for the current c2 block (outer grid axis)
    # z_ref  : (C1T, Q, 1)      Zmean rows for the current c1 block (inner grid axis)
    # out_ref: (C1T, Q, C2T*P)  lane-dense tile, already in the final torch layout
    # m_ref  : VMEM scratch (Q, C2T*P) f32; m[q, c2*P + p] = sum_n A[n,q]*svecs[c2,n,p]
    @pl.when(pl.program_id(1) == 0)
    def _():
        # K = nvec is tiny so MXU cost is negligible; recomputed once per c2 block.
        for c2 in range(c2t):  # static unroll, c2t is a compile-time constant
            m_ref[:, c2 * p:(c2 + 1) * p] = jnp.dot(
                at_ref[...], svs_ref[c2], preferred_element_type=jnp.float32)

    # Hot path: pure broadcast-add + one contiguous lane-dense store.
    #   out[c1, q, c2p] = m[q, c2p] + z[c1, q]
    out_ref[...] = m_ref[...][None, :, :] + z_ref[...]


def tnet_sv_forward(svecs, Zmean, A):
    """Replicates TNet_SV(svecs, Zmean, neural=False).forward() -> (x, A)."""
    s_c, nvec, s_I, s_J = svecs.shape
    # PyTorch broadcasting in `x + Zmean` (non-neural branch) requires s_I, s_J == 16
    # (or 1); we implement the s_I = s_J = 16 case.
    assert s_I == IMG and s_J == IMG, "this kernel assumes s_I == s_J == 16"
    P = s_I * s_J
    assert A.shape == (nvec, Q)

    # Input plumbing (all tiny compared with the s_c^2 * 256 KiB output):
    svs3 = svecs.reshape(s_c, nvec, P).astype(jnp.float32)               # (s_c, nvec, P)
    at = jnp.transpose(A, (1, 0)).astype(jnp.float32)                    # (Q, nvec)
    zq = jnp.transpose(Zmean, (2, 0, 1)).reshape(s_c, Q, 1).astype(jnp.float32)

    # Tile sizing: one (q, p) "face" is Q*P*4 = 256 KiB.  Target ~4 MiB output tiles
    # (C1T*C2T ~= 16 faces); scratch is C2T faces.  Worst case (large s_c):
    # 2 * 4 MiB (double-buffered tile) + 4 MiB scratch + tiny inputs ~= 12 MiB,
    # comfortably inside every generation's scoped VMEM (incl. v7x).
    C2T = min(s_c, 16)
    C1T = min(s_c, max(1, 16 // C2T))
    grid = (pl.cdiv(s_c, C2T), pl.cdiv(s_c, C1T))   # (c2 blocks outer, c1 blocks inner)

    cost = pl.CostEstimate(
        flops=2 * s_c * nvec * Q * P + s_c * s_c * Q * P,
        transcendentals=0,
        bytes_accessed=(s_c * s_c * Q * P + s_c * nvec * P + nvec * Q + s_c * Q) * 4,
    )

    out3 = pl.pallas_call(
        functools.partial(_tnet_sv_kernel, c2t=C2T, p=P),
        out_shape=jax.ShapeDtypeStruct((s_c, Q, s_c * P), jnp.float32),
        grid_spec=pltpu.PrefetchScalarGridSpec(
            num_scalar_prefetch=0,
            grid=grid,
            in_specs=[
                pl.BlockSpec((Q, nvec), lambda j, i: (0, 0)),          # A^T (resident)
                pl.BlockSpec((C2T, nvec, P), lambda j, i: (j, 0, 0)),  # svecs c2 block
                pl.BlockSpec((C1T, Q, 1), lambda j, i: (i, 0, 0)),     # Zmean c1 block
            ],
            out_specs=pl.BlockSpec((C1T, Q, C2T * P), lambda j, i: (i, 0, j)),
            scratch_shapes=[pltpu.VMEM((Q, C2T * P), jnp.float32)],
        ),
        compiler_params=pltpu.CompilerParams(
            # Outer c2-block axis is parallel (safe w.r.t. the scratch init: the inner
            # c1 axis restarts at 0 for every outer index, also under a megacore
            # split).  Inner c1 axis must stay "arbitrary" for the scratch reuse.
            dimension_semantics=("parallel", "arbitrary"),
            vmem_limit_bytes=32 * 1024 * 1024,
        ),
        cost_estimate=cost,
    )(at, svs3, zq)

    # Free reshape to torch's output shape (1, s_c, 16, 16, s_c, s_I*s_J) — no
    # post-kernel transpose pass over the result anymore.
    x = out3.reshape(1, s_c, IMG, IMG, s_c, P)
    return x, A


def _reference_forward(svecs, Zmean, A):
    """Straight jnp transcription of the torch non-neural forward, for checking."""
    s_c, nvec, s_I, s_J = svecs.shape
    svs = jnp.transpose(svecs, (0, 2, 3, 1)).reshape(1, s_c, s_I * s_J, nvec)
    Zm = jnp.transpose(Zmean, (2, 0, 1)).reshape(1, s_c, s_I, s_J, 1, 1)
    x = jnp.matmul(svs, A)                                             # (1, s_c, P, 256)
    xs = x.shape
    x = x.reshape(xs[0], 1, xs[1], xs[2], IMG, IMG).transpose(0, 1, 4, 5, 2, 3)
    x = x + Zm
    return x, A


if __name__ == "__main__":
    key = jax.random.PRNGKey(0)
    k1, k2, k3 = jax.random.split(key, 3)

    # small shapes consistent with the module
    s_c, nvec, s_I, s_J = 2, 8, 16, 16

    svecs = jax.random.normal(k1, (s_c, nvec, s_I, s_J), dtype=jnp.float32)
    Zmean = jax.random.normal(k2, (s_I, s_J, s_c), dtype=jnp.float32)

    # deterministic init of the non-neural parameter A (as in __init__):
    # A0 ~ N(0,1), A0[0,:] = 0, scaled by 0.1
    A0 = jax.random.normal(k3, (nvec, IMG * IMG), dtype=jnp.float32)
    A = A0.at[0, :].set(0.0) * 0.1

    x, A_out = tnet_sv_forward(svecs, Zmean, A)
    x = jax.block_until_ready(x)

    x_ref, _ = _reference_forward(svecs, Zmean, A)
    assert x.shape == (1, s_c, IMG, IMG, s_c, s_I * s_J), x.shape
    assert A_out.shape == (nvec, IMG * IMG)
    assert jnp.allclose(x, x_ref, atol=1e-3, rtol=1e-3), "mismatch vs reference"

    print("KERNEL_OK")
</pallas_src>

<mosaic_0001>
module attributes {stable_mosaic.version = 11 : i64} {
  func.func @_tnet_sv_kernel(%arg0: i32, %arg1: i32, %arg2: memref<256x8xf32, #tpu.memory_space<vmem>>, %arg3: memref<2x8x256xf32, #tpu.memory_space<vmem>>, %arg4: memref<2x256x1xf32, #tpu.memory_space<vmem>>, %arg5: memref<2x256x512xf32, #tpu.memory_space<vmem>>, %arg6: memref<256x512xf32, #tpu.memory_space<vmem>>) attributes {dimension_semantics = [#tpu.dimension_semantics<parallel>, #tpu.dimension_semantics<arbitrary>], iteration_bounds = array<i64: 1, 1>, scalar_prefetch = 0 : i64, scratch_operands = 1 : i64, tpu.core_type = #tpu.core_type<tc>, window_params = [{pipeline_mode = #tpu.pipeline_mode<synchronous>, transform_indices = @transform_0, window_bounds = array<i64: 256, 8>}, {transform_indices = @transform_1, window_bounds = array<i64: 2, 8, 256>}, {transform_indices = @transform_2, window_bounds = array<i64: 2, 256, 1>}, {transform_indices = @transform_3, window_bounds = array<i64: 2, 256, 512>}]} {
    %c0_i32 = arith.constant 0 : i32
    %0 = arith.cmpi eq, %arg1, %c0_i32 : i32
    %1 = arith.extui %0 : i1 to i32
    %c0_i32_0 = arith.constant 0 : i32
    %2 = arith.cmpi ne, %1, %c0_i32_0 : i32
    scf.if %2 {
      %c0_8 = arith.constant 0 : index
      %c0_9 = arith.constant 0 : index
      %10 = vector.load %arg2[%c0_8, %c0_9] : memref<256x8xf32, #tpu.memory_space<vmem>>, vector<256x8xf32>
      %c0_10 = arith.constant 0 : index
      %c0_11 = arith.constant 0 : index
      %c0_12 = arith.constant 0 : index
      %11 = vector.load %arg3[%c0_10, %c0_11, %c0_12] : memref<2x8x256xf32, #tpu.memory_space<vmem>>, vector<1x8x256xf32>
      %12 = vector.shape_cast %11 : vector<1x8x256xf32> to vector<8x256xf32>
      %cst = arith.constant dense<0.000000e+00> : vector<256x256xf32>
      %13 = tpu.matmul %10, %12, %cst {dimension_numbers = #tpu.dot_dimension_numbers<[1], [0], [0], [1], [0, 0, 1, 1], [], []>} : vector<256x8xf32>, vector<8x256xf32>, vector<256x256xf32> -> vector<256x256xf32>
      %c0_13 = arith.constant 0 : index
      %c0_14 = arith.constant 0 : index
      %14 = vector.load %arg6[%c0_13, %c0_14] : memref<256x512xf32, #tpu.memory_space<vmem>>, vector<256x256xf32>
      tpu.vector_store %arg6[%c0_13, %c0_14], %13 {strides = array<i32>} : memref<256x512xf32, #tpu.memory_space<vmem>>, vector<256x256xf32>,
      %c0_15 = arith.constant 0 : index
      %c0_16 = arith.constant 0 : index
      %15 = vector.load %arg2[%c0_15, %c0_16] : memref<256x8xf32, #tpu.memory_space<vmem>>, vector<256x8xf32>
      %c1 = arith.constant 1 : index
      %c0_17 = arith.constant 0 : index
      %c0_18 = arith.constant 0 : index
      %16 = vector.load %arg3[%c1, %c0_17, %c0_18] : memref<2x8x256xf32, #tpu.memory_space<vmem>>, vector<1x8x256xf32>
      %17 = vector.shape_cast %16 : vector<1x8x256xf32> to vector<8x256xf32>
      %cst_19 = arith.constant dense<0.000000e+00> : vector<256x256xf32>
      %18 = tpu.matmul %15, %17, %cst_19 {dimension_numbers = #tpu.dot_dimension_numbers<[1], [0], [0], [1], [0, 0, 1, 1], [], []>} : vector<256x8xf32>, vector<8x256xf32>, vector<256x256xf32> -> vector<256x256xf32>
      %c0_20 = arith.constant 0 : index
      %c256 = arith.constant 256 : index
      %19 = vector.load %arg6[%c0_20, %c256] : memref<256x512xf32, #tpu.memory_space<vmem>>, vector<256x256xf32>
      tpu.vector_store %arg6[%c0_20, %c256], %18 {strides = array<i32>} : memref<256x512xf32, #tpu.memory_space<vmem>>, vector<256x256xf32>,
    } else {
    }
    %c0 = arith.constant 0 : index
    %c0_1 = arith.constant 0 : index
    %3 = vector.load %arg6[%c0, %c0_1] : memref<256x512xf32, #tpu.memory_space<vmem>>, vector<256x512xf32>
    %4 = vector.shape_cast %3 : vector<256x512xf32> to vector<1x256x512xf32>
    %c0_2 = arith.constant 0 : index
    %c0_3 = arith.constant 0 : index
    %c0_4 = arith.constant 0 : index
    %5 = vector.load %arg4[%c0_2, %c0_3, %c0_4] : memref<2x256x1xf32, #tpu.memory_space<vmem>>, vector<2x256x1xf32>
    %6 = vector.broadcast %4 : vector<1x256x512xf32> to vector<2x256x512xf32>
    %7 = vector.broadcast %5 : vector<2x256x1xf32> to vector<2x256x512xf32>
    %8 = arith.addf %6, %7 : vector<2x256x512xf32>
    %c0_5 = arith.constant 0 : index
    %c0_6 = arith.constant 0 : index
    %c0_7 = arith.constant 0 : index
    %9 = vector.load %arg5[%c0_5, %c0_6, %c0_7] : memref<2x256x512xf32, #tpu.memory_space<vmem>>, vector<2x256x512xf32>
    tpu.vector_store %arg5[%c0_5, %c0_6, %c0_7], %8 {strides = array<i32>} : memref<2x256x512xf32, #tpu.memory_space<vmem>>, vector<2x256x512xf32>,
    return
  }
  func.func @transform_0(%arg0: i32, %arg1: i32) -> (i32, i32) {
    %c0_i32 = arith.constant 0 : i32
    %c0_i32_0 = arith.constant 0 : i32
    %c0_i32_1 = arith.constant 0 : i32
    return %c0_i32, %c0_i32_0 : i32, i32
  }
  func.func @transform_1(%arg0: i32, %arg1: i32) -> (i32, i32, i32) {
    %c0_i32 = arith.constant 0 : i32
    %c0_i32_0 = arith.constant 0 : i32
    %c0_i32_1 = arith.constant 0 : i32
    return %arg0, %c0_i32, %c0_i32_0 : i32, i32, i32
  }
  func.func @transform_2(%arg0: i32, %arg1: i32) -> (i32, i32, i32) {
    %c0_i32 = arith.constant 0 : i32
    %c0_i32_0 = arith.constant 0 : i32
    %c0_i32_1 = arith.constant 0 : i32
    return %arg1, %c0_i32, %c0_i32_0 : i32, i32, i32
  }
  func.func @transform_3(%arg0: i32, %arg1: i32) -> (i32, i32, i32) {
    %c0_i32 = arith.constant 0 : i32
    %c0_i32_0 = arith.constant 0 : i32
    return %arg1, %c0_i32, %arg0 : i32, i32, i32
  }
}

</mosaic_0001>

<llo_original>
// kernel: tpu_custom_call.1
$region0: #{tpu_custom_call.1}
  #allocation0 [shape = 'u32[]', space=smem, size = 0x4, offset = 0x4, fixed_abs, tag = 'smem constant byte address 0x4 - core index']
  #allocation1 [shape = 'u32[72,128]{1,0:T(1,128)}', space=vmem, size = 0x9000, scoped, tag = 'internal scratch']
  #allocation2 [shape = 'f32[256,512]{1,0:T(8,128)}', space=vmem, size = 0x80000, scoped, tag = 'scratch operand']
  %s0 = inlined_call_operand.vmem [shape: f32[256,8], index: 0, kind: input, shape index: {}]
  %s1 = inlined_call_operand.vmem [shape: f32[2,8,256], index: 1, kind: input, shape index: {}]
  %s2 = inlined_call_operand.vmem [shape: f32[2,256,1], index: 2, kind: input, shape index: {}]
  %s3 = inlined_call_operand.hbm [shape: f32[2,256,512], index: 3, kind: output, shape index: {}]
  %s4 = sld [smem:[#allocation0]]
  $region26: #{tpu_custom_call.1} parent=0
    _
  %s6 = ssub.s32 1, %s4
  %s7 = scalar_select 0, %s6, %s4
  $region1: #{tpu_custom_call.1} parent=0
    #allocation3 [shape = 'u8[1048576]{0}', space=vmem, size = 0x100000, scoped, tag = 'output window, operand 0, single buffered']
    #allocation4 [shape = 's32[1]{0}', space=sflag, size = 0x4, scoped, tag = 'scoped memory for tpu_custom_call.1']
    %8 = vsyncpa [#allocation4], 0
    // Predicated region
    $region2: #{tpu_custom_call.1} parent=1 // pred_check
      _
    $region3: #{tpu_custom_call.1} parent=1 // pred_check_branch
      %10 = sbr.rel (0) target = $region5
    $region4: #{tpu_custom_call.1} parent=1 // pred_region
      _
    $region5: #{tpu_custom_call.1} parent=1 // pred_fallthru
      _
    // Predicated region
    $region6: #{tpu_custom_call.1} parent=1 // pred_check
      _
    $region7: #{tpu_custom_call.1} parent=1 // pred_check_branch
      %12 = sbr.rel (0) target = $region9
    $region8: #{tpu_custom_call.1} parent=1 // pred_region
      _
    $region9: #{tpu_custom_call.1} parent=1 // pred_fallthru
      _
    // Predicated region
    $region10: #{tpu_custom_call.1} parent=1 // pred_check
      _
    $region11: #{tpu_custom_call.1} parent=1 // pred_check_branch
      %14 = sbr.rel (0) target = $region13
    $region12: #{tpu_custom_call.1} parent=1 // pred_region
      _
    $region13: #{tpu_custom_call.1} parent=1 // pred_fallthru
      _
    %p15 = scmp.eq.s32.totalorder 0, 0
    // Predicated region
    $region14: #{tpu_custom_call.1} parent=1 // pred_check
      %p16 = pneg %p15
    $region15: #{tpu_custom_call.1} parent=1 // pred_check_branch
      %18 = sbr.rel (%p16) target = $region17
    $region16: #{tpu_custom_call.1} parent=1 // pred_region
      %v19 = vld [vmem:[%s0] sm:$0xff]
      %v20 = vld [vmem:[%s0 + $0x8] sm:$0xff]
      %v21 = vld [vmem:[%s0 + $0x10] sm:$0xff]
      %v22 = vld [vmem:[%s0 + $0x18] sm:$0xff]
      %v23 = vld [vmem:[%s0 + $0x20] sm:$0xff]
      %v24 = vld [vmem:[%s0 + $0x28] sm:$0xff]
      %v25 = vld [vmem:[%s0 + $0x30] sm:$0xff]
      %v26 = vld [vmem:[%s0 + $0x38] sm:$0xff]
      %v27 = vld [vmem:[%s0 + $0x40] sm:$0xff]
      %v28 = vld [vmem:[%s0 + $0x48] sm:$0xff]
      %v29 = vld [vmem:[%s0 + $0x50] sm:$0xff]
      %v30 = vld [vmem:[%s0 + $0x58] sm:$0xff]
      %v31 = vld [vmem:[%s0 + $0x60] sm:$0xff]
      %v32 = vld [vmem:[%s0 + $0x68] sm:$0xff]
      %v33 = vld [vmem:[%s0 + $0x70] sm:$0xff]
      %v34 = vld [vmem:[%s0 + $0x78] sm:$0xff]
      %v35 = vld [vmem:[%s0 + $0x80] sm:$0xff]
      %v36 = vld [vmem:[%s0 + $0x88] sm:$0xff]
      %v37 = vld [vmem:[%s0 + $0x90] sm:$0xff]
      %v38 = vld [vmem:[%s0 + $0x98] sm:$0xff]
      %v39 = vld [vmem:[%s0 + $0xa0] sm:$0xff]
      %v40 = vld [vmem:[%s0 + $0xa8] sm:$0xff]
      %v41 = vld [vmem:[%s0 + $0xb0] sm:$0xff]
      %v42 = vld [vmem:[%s0 + $0xb8] sm:$0xff]
      %v43 = vld [vmem:[%s0 + $0xc0] sm:$0xff]
      %v44 = vld [vmem:[%s0 + $0xc8] sm:$0xff]
      %v45 = vld [vmem:[%s0 + $0xd0] sm:$0xff]
      %v46 = vld [vmem:[%s0 + $0xd8] sm:$0xff]
      %v47 = vld [vmem:[%s0 + $0xe0] sm:$0xff]
      %v48 = vld [vmem:[%s0 + $0xe8] sm:$0xff]
      %v49 = vld [vmem:[%s0 + $0xf0] sm:$0xff]
      %v50 = vld [vmem:[%s0 + $0xf8] sm:$0xff]
      %v51 = vld [vmem:[%s1] sm:$0xff]
      %v52 = vld [vmem:[%s1 + $0x8] sm:$0xff]
      %vm53 = vcmask 64512
      %v55 = vsel %vm53, %v19, 0
      %v58 = vsel %vm53, %v20, 0
      %v61 = vsel %vm53, %v21, 0
      %v64 = vsel %vm53, %v22, 0
      %v67 = vsel %vm53, %v23, 0
      %v70 = vsel %vm53, %v24, 0
      %v73 = vsel %vm53, %v25, 0
      %v76 = vsel %vm53, %v26, 0
      %v79 = vsel %vm53, %v27, 0
      %v82 = vsel %vm53, %v28, 0
      %v85 = vsel %vm53, %v29, 0
      %v88 = vsel %vm53, %v30, 0
      %v91 = vsel %vm53, %v31, 0
      %v94 = vsel %vm53, %v32, 0
      %v97 = vsel %vm53, %v33, 0
      %v100 = vsel %vm53, %v34, 0
      %v103 = vsel %vm53, %v35, 0
      %v106 = vsel %vm53, %v36, 0
      %v109 = vsel %vm53, %v37, 0
      %v112 = vsel %vm53, %v38, 0
      %v115 = vsel %vm53, %v39, 0
      %v118 = vsel %vm53, %v40, 0
      %v121 = vsel %vm53, %v41, 0
      %v124 = vsel %vm53, %v42, 0
      %v127 = vsel %vm53, %v43, 0
      %v130 = vsel %vm53, %v44, 0
      %v133 = vsel %vm53, %v45, 0
      %v136 = vsel %vm53, %v46, 0
      %v139 = vsel %vm53, %v47, 0
      %v142 = vsel %vm53, %v48, 0
      %v145 = vsel %vm53, %v49, 0
      %v148 = vsel %vm53, %v50, 0
      %150 = vmatpush.msra.mxu0 0.0
      %151 = vmatpush.msra.mxu0 0.0
      %152 = vmatpush.msra.mxu0 0.0
      %153 = vmatpush.msra.mxu0 0.0
      %154 = vmatpush.msra.mxu0 0.0
      %155 = vmatpush.msra.mxu0 0.0
      %156 = vmatpush.msra.mxu0 0.0
      %157 = vmatpush.msra.mxu0 0.0
      %158 = vmatpush.msra.mxu0 0.0
      %159 = vmatpush.msra.mxu0 0.0
      %160 = vmatpush.msra.mxu0 0.0
      %161 = vmatpush.msra.mxu0 0.0
      %162 = vmatpush.msra.mxu0 0.0
      %163 = vmatpush.msra.mxu0 0.0
      %164 = vmatpush.msra.mxu0 0.0
      %165 = vmatpush.msra.mxu0 %v51
      %166 = vmatmul.f32.gmra.mxu0 %v55
      %v167 = vpop.f32.mrf.mxu0
      %v168 = vadd.f32 0.0, %v167
      %169 = vmatmul.f32.gmra.mxu0 %v58
      %v170 = vpop.f32.mrf.mxu0
      %v171 = vadd.f32 0.0, %v170
      %172 = vmatmul.f32.gmra.mxu0 %v61
      %v173 = vpop.f32.mrf.mxu0
      %v174 = vadd.f32 0.0, %v173
      %175 = vmatmul.f32.gmra.mxu0 %v64
      %v176 = vpop.f32.mrf.mxu0
      %v177 = vadd.f32 0.0, %v176
      %178 = vmatmul.f32.gmra.mxu0 %v67
      %v179 = vpop.f32.mrf.mxu0
      %v180 = vadd.f32 0.0, %v179
      %181 = vmatmul.f32.gmra.mxu0 %v70
      %v182 = vpop.f32.mrf.mxu0
      %v183 = vadd.f32 0.0, %v182
      %184 = vmatmul.f32.gmra.mxu0 %v73
      %v185 = vpop.f32.mrf.mxu0
      %v186 = vadd.f32 0.0, %v185
      %187 = vmatmul.f32.gmra.mxu0 %v76
      %v188 = vpop.f32.mrf.mxu0
      %v189 = vadd.f32 0.0, %v188
      %190 = vmatmul.f32.gmra.mxu0 %v79
      %v191 = vpop.f32.mrf.mxu0
      %v192 = vadd.f32 0.0, %v191
      %193 = vmatmul.f32.gmra.mxu0 %v82
      %v194 = vpop.f32.mrf.mxu0
      %v195 = vadd.f32 0.0, %v194
      %196 = vmatmul.f32.gmra.mxu0 %v85
      %v197 = vpop.f32.mrf.mxu0
      %v198 = vadd.f32 0.0, %v197
      %199 = vmatmul.f32.gmra.mxu0 %v88
      %v200 = vpop.f32.mrf.mxu0
      %v201 = vadd.f32 0.0, %v200
      %202 = vmatmul.f32.gmra.mxu0 %v91
      %v203 = vpop.f32.mrf.mxu0
      %v204 = vadd.f32 0.0, %v203
      %205 = vmatmul.f32.gmra.mxu0 %v94
      %v206 = vpop.f32.mrf.mxu0
      %v207 = vadd.f32 0.0, %v206
      %208 = vmatmul.f32.gmra.mxu0 %v97
      %v209 = vpop.f32.mrf.mxu0
      %v210 = vadd.f32 0.0, %v209
      %211 = vmatmul.f32.gmra.mxu0 %v100
      %v212 = vpop.f32.mrf.mxu0
      %v213 = vadd.f32 0.0, %v212
      %214 = vmatmul.f32.gmra.mxu0 %v103
      %v215 = vpop.f32.mrf.mxu0
      %v216 = vadd.f32 0.0, %v215
      %217 = vmatmul.f32.gmra.mxu0 %v106
      %v218 = vpop.f32.mrf.mxu0
      %v219 = vadd.f32 0.0, %v218
      %220 = vmatmul.f32.gmra.mxu0 %v109
      %v221 = vpop.f32.mrf.mxu0
      %v222 = vadd.f32 0.0, %v221
      %223 = vmatmul.f32.gmra.mxu0 %v112
      %v224 = vpop.f32.mrf.mxu0
      %v225 = vadd.f32 0.0, %v224
      %226 = vmatmul.f32.gmra.mxu0 %v115
      %v227 = vpop.f32.mrf.mxu0
      %v228 = vadd.f32 0.0, %v227
      %229 = vmatmul.f32.gmra.mxu0 %v118
      %v230 = vpop.f32.mrf.mxu0
      %v231 = vadd.f32 0.0, %v230
      %232 = vmatmul.f32.gmra.mxu0 %v121
      %v233 = vpop.f32.mrf.mxu0
      %v234 = vadd.f32 0.0, %v233
      %235 = vmatmul.f32.gmra.mxu0 %v124
      %v236 = vpop.f32.mrf.mxu0
      %v237 = vadd.f32 0.0, %v236
      %238 = vmatmul.f32.gmra.mxu0 %v127
      %v239 = vpop.f32.mrf.mxu0
      %v240 = vadd.f32 0.0, %v239
      %241 = vmatmul.f32.gmra.mxu0 %v130
      %v242 = vpop.f32.mrf.mxu0
      %v243 = vadd.f32 0.0, %v242
      %244 = vmatmul.f32.gmra.mxu0 %v133
      %v245 = vpop.f32.mrf.mxu0
      %v246 = vadd.f32 0.0, %v245
      %247 = vmatmul.f32.gmra.mxu0 %v136
      %v248 = vpop.f32.mrf.mxu0
      %v249 = vadd.f32 0.0, %v248
      %250 = vmatmul.f32.gmra.mxu0 %v139
      %v251 = vpop.f32.mrf.mxu0
      %v252 = vadd.f32 0.0, %v251
      %253 = vmatmul.f32.gmra.mxu0 %v142
      %v254 = vpop.f32.mrf.mxu0
      %v255 = vadd.f32 0.0, %v254
      %256 = vmatmul.f32.gmra.mxu0 %v145
      %v257 = vpop.f32.mrf.mxu0
      %v258 = vadd.f32 0.0, %v257
      %259 = vmatmul.f32.gmra.mxu0 %v148
      %v260 = vpop.f32.mrf.mxu0
      %v261 = vadd.f32 0.0, %v260
      %262 = vdwg.mxu0
      %263 = vmatpush.msra.mxu0 0.0
      %264 = vmatpush.msra.mxu0 0.0
      %265 = vmatpush.msra.mxu0 0.0
      %266 = vmatpush.msra.mxu0 0.0
      %267 = vmatpush.msra.mxu0 0.0
      %268 = vmatpush.msra.mxu0 0.0
      %269 = vmatpush.msra.mxu0 0.0
      %270 = vmatpush.msra.mxu0 0.0
      %271 = vmatpush.msra.mxu0 0.0
      %272 = vmatpush.msra.mxu0 0.0
      %273 = vmatpush.msra.mxu0 0.0
      %274 = vmatpush.msra.mxu0 0.0
      %275 = vmatpush.msra.mxu0 0.0
      %276 = vmatpush.msra.mxu0 0.0
      %277 = vmatpush.msra.mxu0 0.0
      %278 = vmatpush.msra.mxu0 %v52
      %279 = vmatmul.f32.gmra.mxu0 %v55
      %v280 = vpop.f32.mrf.mxu0
      %v281 = vadd.f32 0.0, %v280
      %282 = vmatmul.f32.gmra.mxu0 %v58
      %v283 = vpop.f32.mrf.mxu0
      %v284 = vadd.f32 0.0, %v283
      %285 = vmatmul.f32.gmra.mxu0 %v61
      %v286 = vpop.f32.mrf.mxu0
      %v287 = vadd.f32 0.0, %v286
      %288 = vmatmul.f32.gmra.mxu0 %v64
      %v289 = vpop.f32.mrf.mxu0
      %v290 = vadd.f32 0.0, %v289
      %291 = vmatmul.f32.gmra.mxu0 %v67
      %v292 = vpop.f32.mrf.mxu0
      %v293 = vadd.f32 0.0, %v292
      %294 = vmatmul.f32.gmra.mxu0 %v70
      %v295 = vpop.f32.mrf.mxu0
      %v296 = vadd.f32 0.0, %v295
      %297 = vmatmul.f32.gmra.mxu0 %v73
      %v298 = vpop.f32.mrf.mxu0
      %v299 = vadd.f32 0.0, %v298
      %300 = vmatmul.f32.gmra.mxu0 %v76
      %v301 = vpop.f32.mrf.mxu0
      %v302 = vadd.f32 0.0, %v301
      %303 = vmatmul.f32.gmra.mxu0 %v79
      %v304 = vpop.f32.mrf.mxu0
      %v305 = vadd.f32 0.0, %v304
      %306 = vmatmul.f32.gmra.mxu0 %v82
      %v307 = vpop.f32.mrf.mxu0
      %v308 = vadd.f32 0.0, %v307
      %309 = vmatmul.f32.gmra.mxu0 %v85
      %v310 = vpop.f32.mrf.mxu0
      %v311 = vadd.f32 0.0, %v310
      %312 = vmatmul.f32.gmra.mxu0 %v88
      %v313 = vpop.f32.mrf.mxu0
      %v314 = vadd.f32 0.0, %v313
      %315 = vmatmul.f32.gmra.mxu0 %v91
      %v316 = vpop.f32.mrf.mxu0
      %v317 = vadd.f32 0.0, %v316
      %318 = vmatmul.f32.gmra.mxu0 %v94
      %v319 = vpop.f32.mrf.mxu0
      %v320 = vadd.f32 0.0, %v319
      %321 = vmatmul.f32.gmra.mxu0 %v97
      %v322 = vpop.f32.mrf.mxu0
      %v323 = vadd.f32 0.0, %v322
      %324 = vmatmul.f32.gmra.mxu0 %v100
      %v325 = vpop.f32.mrf.mxu0
      %v326 = vadd.f32 0.0, %v325
      %327 = vmatmul.f32.gmra.mxu0 %v103
      %v328 = vpop.f32.mrf.mxu0
      %v329 = vadd.f32 0.0, %v328
      %330 = vmatmul.f32.gmra.mxu0 %v106
      %v331 = vpop.f32.mrf.mxu0
      %v332 = vadd.f32 0.0, %v331
      %333 = vmatmul.f32.gmra.mxu0 %v109
      %v334 = vpop.f32.mrf.mxu0
      %v335 = vadd.f32 0.0, %v334
      %336 = vmatmul.f32.gmra.mxu0 %v112
      %v337 = vpop.f32.mrf.mxu0
      %v338 = vadd.f32 0.0, %v337
      %339 = vmatmul.f32.gmra.mxu0 %v115
      %v340 = vpop.f32.mrf.mxu0
      %v341 = vadd.f32 0.0, %v340
      %342 = vmatmul.f32.gmra.mxu0 %v118
      %v343 = vpop.f32.mrf.mxu0
      %v344 = vadd.f32 0.0, %v343
      %345 = vmatmul.f32.gmra.mxu0 %v121
      %v346 = vpop.f32.mrf.mxu0
      %v347 = vadd.f32 0.0, %v346
      %348 = vmatmul.f32.gmra.mxu0 %v124
      %v349 = vpop.f32.mrf.mxu0
      %v350 = vadd.f32 0.0, %v349
      %351 = vmatmul.f32.gmra.mxu0 %v127
      %v352 = vpop.f32.mrf.mxu0
      %v353 = vadd.f32 0.0, %v352
      %354 = vmatmul.f32.gmra.mxu0 %v130
      %v355 = vpop.f32.mrf.mxu0
      %v356 = vadd.f32 0.0, %v355
      %357 = vmatmul.f32.gmra.mxu0 %v133
      %v358 = vpop.f32.mrf.mxu0
      %v359 = vadd.f32 0.0, %v358
      %360 = vmatmul.f32.gmra.mxu0 %v136
      %v361 = vpop.f32.mrf.mxu0
      %v362 = vadd.f32 0.0, %v361
      %363 = vmatmul.f32.gmra.mxu0 %v139
      %v364 = vpop.f32.mrf.mxu0
      %v365 = vadd.f32 0.0, %v364
      %366 = vmatmul.f32.gmra.mxu0 %v142
      %v367 = vpop.f32.mrf.mxu0
      %v368 = vadd.f32 0.0, %v367
      %369 = vmatmul.f32.gmra.mxu0 %v145
      %v370 = vpop.f32.mrf.mxu0
      %v371 = vadd.f32 0.0, %v370
      %372 = vmatmul.f32.gmra.mxu0 %v148
      %v373 = vpop.f32.mrf.mxu0
      %v374 = vadd.f32 0.0, %v373
      %375 = vdwg.mxu0
      %376 = vst [vmem:[#allocation2] sm:$0xff] %v168
      %377 = vst [vmem:[#allocation2 + $0x8] sm:$0xff] %v281
      %378 = vst [vmem:[#allocation2 + $0x20] sm:$0xff] %v171
      %379 = vst [vmem:[#allocation2 + $0x28] sm:$0xff] %v284
      %380 = vst [vmem:[#allocation2 + $0x40] sm:$0xff] %v174
      %381 = vst [vmem:[#allocation2 + $0x48] sm:$0xff] %v287
      %382 = vst [vmem:[#allocation2 + $0x60] sm:$0xff] %v177
      %383 = vst [vmem:[#allocation2 + $0x68] sm:$0xff] %v290
      %384 = vst [vmem:[#allocation2 + $0x80] sm:$0xff] %v180
      %385 = vst [vmem:[#allocation2 + $0x88] sm:$0xff] %v293
      %386 = vst [vmem:[#allocation2 + $0xa0] sm:$0xff] %v183
      %387 = vst [vmem:[#allocation2 + $0xa8] sm:$0xff] %v296
      %388 = vst [vmem:[#allocation2 + $0xc0] sm:$0xff] %v186
      %389 = vst [vmem:[#allocation2 + $0xc8] sm:$0xff] %v299
      %390 = vst [vmem:[#allocation2 + $0xe0] sm:$0xff] %v189
      %391 = vst [vmem:[#allocation2 + $0xe8] sm:$0xff] %v302
      %392 = vst [vmem:[#allocation2 + $0x100] sm:$0xff] %v192
      %393 = vst [vmem:[#allocation2 + $0x108] sm:$0xff] %v305
      %394 = vst [vmem:[#allocation2 + $0x120] sm:$0xff] %v195
      %395 = vst [vmem:[#allocation2 + $0x128] sm:$0xff] %v308
      %396 = vst [vmem:[#allocation2 + $0x140] sm:$0xff] %v198
      %397 = vst [vmem:[#allocation2 + $0x148] sm:$0xff] %v311
      %398 = vst [vmem:[#allocation2 + $0x160] sm:$0xff] %v201
      %399 = vst [vmem:[#allocation2 + $0x168] sm:$0xff] %v314
      %400 = vst [vmem:[#allocation2 + $0x180] sm:$0xff] %v204
      %401 = vst [vmem:[#allocation2 + $0x188] sm:$0xff] %v317
      %402 = vst [vmem:[#allocation2 + $0x1a0] sm:$0xff] %v207
      %403 = vst [vmem:[#allocation2 + $0x1a8] sm:$0xff] %v320
      %404 = vst [vmem:[#allocation2 + $0x1c0] sm:$0xff] %v210
      %405 = vst [vmem:[#allocation2 + $0x1c8] sm:$0xff] %v323
      %406 = vst [vmem:[#allocation2 + $0x1e0] sm:$0xff] %v213
      %407 = vst [vmem:[#allocation2 + $0x1e8] sm:$0xff] %v326
      %408 = vst [vmem:[#allocation2 + $0x200] sm:$0xff] %v216
      %409 = vst [vmem:[#allocation2 + $0x208] sm:$0xff] %v329
      %410 = vst [vmem:[#allocation2 + $0x220] sm:$0xff] %v219
      %411 = vst [vmem:[#allocation2 + $0x228] sm:$0xff] %v332
      %412 = vst [vmem:[#allocation2 + $0x240] sm:$0xff] %v222
      %413 = vst [vmem:[#allocation2 + $0x248] sm:$0xff] %v335
      %414 = vst [vmem:[#allocation2 + $0x260] sm:$0xff] %v225
      %415 = vst [vmem:[#allocation2 + $0x268] sm:$0xff] %v338
      %416 = vst [vmem:[#allocation2 + $0x280] sm:$0xff] %v228
      %417 = vst [vmem:[#allocation2 + $0x288] sm:$0xff] %v341
      %418 = vst [vmem:[#allocation2 + $0x2a0] sm:$0xff] %v231
      %419 = vst [vmem:[#allocation2 + $0x2a8] sm:$0xff] %v344
      %420 = vst [vmem:[#allocation2 + $0x2c0] sm:$0xff] %v234
      %421 = vst [vmem:[#allocation2 + $0x2c8] sm:$0xff] %v347
      %422 = vst [vmem:[#allocation2 + $0x2e0] sm:$0xff] %v237
      %423 = vst [vmem:[#allocation2 + $0x2e8] sm:$0xff] %v350
      %424 = vst [vmem:[#allocation2 + $0x300] sm:$0xff] %v240
      %425 = vst [vmem:[#allocation2 + $0x308] sm:$0xff] %v353
      %426 = vst [vmem:[#allocation2 + $0x320] sm:$0xff] %v243
      %427 = vst [vmem:[#allocation2 + $0x328] sm:$0xff] %v356
      %428 = vst [vmem:[#allocation2 + $0x340] sm:$0xff] %v246
      %429 = vst [vmem:[#allocation2 + $0x348] sm:$0xff] %v359
      %430 = vst [vmem:[#allocation2 + $0x360] sm:$0xff] %v249
      %431 = vst [vmem:[#allocation2 + $0x368] sm:$0xff] %v362
      %432 = vst [vmem:[#allocation2 + $0x380] sm:$0xff] %v252
      %433 = vst [vmem:[#allocation2 + $0x388] sm:$0xff] %v365
      %434 = vst [vmem:[#allocation2 + $0x3a0] sm:$0xff] %v255
      %435 = vst [vmem:[#allocation2 + $0x3a8] sm:$0xff] %v368
      %436 = vst [vmem:[#allocation2 + $0x3c0] sm:$0xff] %v258
      %437 = vst [vmem:[#allocation2 + $0x3c8] sm:$0xff] %v371
      %438 = vst [vmem:[#allocation2 + $0x3e0] sm:$0xff] %v261
      %439 = vst [vmem:[#allocation2 + $0x3e8] sm:$0xff] %v374
      %v440 = vld [vmem:[%s0] sm:$0xff]
      %v441 = vld [vmem:[%s0 + $0x8] sm:$0xff]
      %v442 = vld [vmem:[%s0 + $0x10] sm:$0xff]
      %v443 = vld [vmem:[%s0 + $0x18] sm:$0xff]
      %v444 = vld [vmem:[%s0 + $0x20] sm:$0xff]
      %v445 = vld [vmem:[%s0 + $0x28] sm:$0xff]
      %v446 = vld [vmem:[%s0 + $0x30] sm:$0xff]
      %v447 = vld [vmem:[%s0 + $0x38] sm:$0xff]
      %v448 = vld [vmem:[%s0 + $0x40] sm:$0xff]
      %v449 = vld [vmem:[%s0 + $0x48] sm:$0xff]
      %v450 = vld [vmem:[%s0 + $0x50] sm:$0xff]
      %v451 = vld [vmem:[%s0 + $0x58] sm:$0xff]
      %v452 = vld [vmem:[%s0 + $0x60] sm:$0xff]
      %v453 = vld [vmem:[%s0 + $0x68] sm:$0xff]
      %v454 = vld [vmem:[%s0 + $0x70] sm:$0xff]
      %v455 = vld [vmem:[%s0 + $0x78] sm:$0xff]
      %v456 = vld [vmem:[%s0 + $0x80] sm:$0xff]
      %v457 = vld [vmem:[%s0 + $0x88] sm:$0xff]
      %v458 = vld [vmem:[%s0 + $0x90] sm:$0xff]
      %v459 = vld [vmem:[%s0 + $0x98] sm:$0xff]
      %v460 = vld [vmem:[%s0 + $0xa0] sm:$0xff]
      %v461 = vld [vmem:[%s0 + $0xa8] sm:$0xff]
      %v462 = vld [vmem:[%s0 + $0xb0] sm:$0xff]
      %v463 = vld [vmem:[%s0 + $0xb8] sm:$0xff]
      %v464 = vld [vmem:[%s0 + $0xc0] sm:$0xff]
      %v465 = vld [vmem:[%s0 + $0xc8] sm:$0xff]
      %v466 = vld [vmem:[%s0 + $0xd0] sm:$0xff]
      %v467 = vld [vmem:[%s0 + $0xd8] sm:$0xff]
      %v468 = vld [vmem:[%s0 + $0xe0] sm:$0xff]
      %v469 = vld [vmem:[%s0 + $0xe8] sm:$0xff]
      %v470 = vld [vmem:[%s0 + $0xf0] sm:$0xff]
      %v471 = vld [vmem:[%s0 + $0xf8] sm:$0xff]
      %s472 = scalar_lea.vmem %s1, 16
      %v473 = vld [vmem:[%s472] sm:$0xff]
      %v474 = vld [vmem:[%s472 + $0x8] sm:$0xff]
      %v476 = vsel %vm53, %v440, 0
      %v479 = vsel %vm53, %v441, 0
      %v482 = vsel %vm53, %v442, 0
      %v485 = vsel %vm53, %v443, 0
      %v488 = vsel %vm53, %v444, 0
      %v491 = vsel %vm53, %v445, 0
      %v494 = vsel %vm53, %v446, 0
      %v497 = vsel %vm53, %v447, 0
      %v500 = vsel %vm53, %v448, 0
      %v503 = vsel %vm53, %v449, 0
      %v506 = vsel %vm53, %v450, 0
      %v509 = vsel %vm53, %v451, 0
      %v512 = vsel %vm53, %v452, 0
      %v515 = vsel %vm53, %v453, 0
      %v518 = vsel %vm53, %v454, 0
      %v521 = vsel %vm53, %v455, 0
      %v524 = vsel %vm53, %v456, 0
      %v527 = vsel %vm53, %v457, 0
      %v530 = vsel %vm53, %v458, 0
      %v533 = vsel %vm53, %v459, 0
      %v536 = vsel %vm53, %v460, 0
      %v539 = vsel %vm53, %v461, 0
      %v542 = vsel %vm53, %v462, 0
      %v545 = vsel %vm53, %v463, 0
      %v548 = vsel %vm53, %v464, 0
      %v551 = vsel %vm53, %v465, 0
      %v554 = vsel %vm53, %v466, 0
      %v557 = vsel %vm53, %v467, 0
      %v560 = vsel %vm53, %v468, 0
      %v563 = vsel %vm53, %v469, 0
      %v566 = vsel %vm53, %v470, 0
      %v569 = vsel %vm53, %v471, 0
      %571 = vmatpush.msra.mxu0 0.0
      %572 = vmatpush.msra.mxu0 0.0
      %573 = vmatpush.msra.mxu0 0.0
      %574 = vmatpush.msra.mxu0 0.0
      %575 = vmatpush.msra.mxu0 0.0
      %576 = vmatpush.msra.mxu0 0.0
      %577 = vmatpush.msra.mxu0 0.0
      %578 = vmatpush.msra.mxu0 0.0
      %579 = vmatpush.msra.mxu0 0.0
      %580 = vmatpush.msra.mxu0 0.0
      %581 = vmatpush.msra.mxu0 0.0
      %582 = vmatpush.msra.mxu0 0.0
      %583 = vmatpush.msra.mxu0 0.0
      %584 = vmatpush.msra.mxu0 0.0
      %585 = vmatpush.msra.mxu0 0.0
      %586 = vmatpush.msra.mxu0 %v473
      %587 = vmatmul.f32.gmra.mxu0 %v476
      %v588 = vpop.f32.mrf.mxu0
      %v589 = vadd.f32 0.0, %v588
      %590 = vmatmul.f32.gmra.mxu0 %v479
      %v591 = vpop.f32.mrf.mxu0
      %v592 = vadd.f32 0.0, %v591
      %593 = vmatmul.f32.gmra.mxu0 %v482
      %v594 = vpop.f32.mrf.mxu0
      %v595 = vadd.f32 0.0, %v594
      %596 = vmatmul.f32.gmra.mxu0 %v485
      %v597 = vpop.f32.mrf.mxu0
      %v598 = vadd.f32 0.0, %v597
      %599 = vmatmul.f32.gmra.mxu0 %v488
      %v600 = vpop.f32.mrf.mxu0
      %v601 = vadd.f32 0.0, %v600
      %602 = vmatmul.f32.gmra.mxu0 %v491
      %v603 = vpop.f32.mrf.mxu0
      %v604 = vadd.f32 0.0, %v603
      %605 = vmatmul.f32.gmra.mxu0 %v494
      %v606 = vpop.f32.mrf.mxu0
      %v607 = vadd.f32 0.0, %v606
      %608 = vmatmul.f32.gmra.mxu0 %v497
      %v609 = vpop.f32.mrf.mxu0
      %v610 = vadd.f32 0.0, %v609
      %611 = vmatmul.f32.gmra.mxu0 %v500
      %v612 = vpop.f32.mrf.mxu0
      %v613 = vadd.f32 0.0, %v612
      %614 = vmatmul.f32.gmra.mxu0 %v503
      %v615 = vpop.f32.mrf.mxu0
      %v616 = vadd.f32 0.0, %v615
      %617 = vmatmul.f32.gmra.mxu0 %v506
      %v618 = vpop.f32.mrf.mxu0
      %v619 = vadd.f32 0.0, %v618
      %620 = vmatmul.f32.gmra.mxu0 %v509
      %v621 = vpop.f32.mrf.mxu0
      %v622 = vadd.f32 0.0, %v621
      %623 = vmatmul.f32.gmra.mxu0 %v512
      %v624 = vpop.f32.mrf.mxu0
      %v625 = vadd.f32 0.0, %v624
      %626 = vmatmul.f32.gmra.mxu0 %v515
      %v627 = vpop.f32.mrf.mxu0
      %v628 = vadd.f32 0.0, %v627
      %629 = vmatmul.f32.gmra.mxu0 %v518
      %v630 = vpop.f32.mrf.mxu0
      %v631 = vadd.f32 0.0, %v630
      %632 = vmatmul.f32.gmra.mxu0 %v521
      %v633 = vpop.f32.mrf.mxu0
      %v634 = vadd.f32 0.0, %v633
      %635 = vmatmul.f32.gmra.mxu0 %v524
      %v636 = vpop.f32.mrf.mxu0
      %v637 = vadd.f32 0.0, %v636
      %638 = vmatmul.f32.gmra.mxu0 %v527
      %v639 = vpop.f32.mrf.mxu0
      %v640 = vadd.f32 0.0, %v639
      %641 = vmatmul.f32.gmra.mxu0 %v530
      %v642 = vpop.f32.mrf.mxu0
      %v643 = vadd.f32 0.0, %v642
      %644 = vmatmul.f32.gmra.mxu0 %v533
      %v645 = vpop.f32.mrf.mxu0
      %v646 = vadd.f32 0.0, %v645
      %647 = vmatmul.f32.gmra.mxu0 %v536
      %v648 = vpop.f32.mrf.mxu0
      %v649 = vadd.f32 0.0, %v648
      %650 = vmatmul.f32.gmra.mxu0 %v539
      %v651 = vpop.f32.mrf.mxu0
      %v652 = vadd.f32 0.0, %v651
      %653 = vmatmul.f32.gmra.mxu0 %v542
      %v654 = vpop.f32.mrf.mxu0
      %v655 = vadd.f32 0.0, %v654
      %656 = vmatmul.f32.gmra.mxu0 %v545
      %v657 = vpop.f32.mrf.mxu0
      %v658 = vadd.f32 0.0, %v657
      %659 = vmatmul.f32.gmra.mxu0 %v548
      %v660 = vpop.f32.mrf.mxu0
      %v661 = vadd.f32 0.0, %v660
      %662 = vmatmul.f32.gmra.mxu0 %v551
      %v663 = vpop.f32.mrf.mxu0
      %v664 = vadd.f32 0.0, %v663
      %665 = vmatmul.f32.gmra.mxu0 %v554
      %v666 = vpop.f32.mrf.mxu0
      %v667 = vadd.f32 0.0, %v666
      %668 = vmatmul.f32.gmra.mxu0 %v557
      %v669 = vpop.f32.mrf.mxu0
      %v670 = vadd.f32 0.0, %v669
      %671 = vmatmul.f32.gmra.mxu0 %v560
      %v672 = vpop.f32.mrf.mxu0
      %v673 = vadd.f32 0.0, %v672
      %674 = vmatmul.f32.gmra.mxu0 %v563
      %v675 = vpop.f32.mrf.mxu0
      %v676 = vadd.f32 0.0, %v675
      %677 = vmatmul.f32.gmra.mxu0 %v566
      %v678 = vpop.f32.mrf.mxu0
      %v679 = vadd.f32 0.0, %v678
      %680 = vmatmul.f32.gmra.mxu0 %v569
      %v681 = vpop.f32.mrf.mxu0
      %v682 = vadd.f32 0.0, %v681
      %683 = vdwg.mxu0
      %684 = vmatpush.msra.mxu0 0.0
      %685 = vmatpush.msra.mxu0 0.0
      %686 = vmatpush.msra.mxu0 0.0
      %687 = vmatpush.msra.mxu0 0.0
      %688 = vmatpush.msra.mxu0 0.0
      %689 = vmatpush.msra.mxu0 0.0
      %690 = vmatpush.msra.mxu0 0.0
      %691 = vmatpush.msra.mxu0 0.0
      %692 = vmatpush.msra.mxu0 0.0
      %693 = vmatpush.msra.mxu0 0.0
      %694 = vmatpush.msra.mxu0 0.0
      %695 = vmatpush.msra.mxu0 0.0
      %696 = vmatpush.msra.mxu0 0.0
      %697 = vmatpush.msra.mxu0 0.0
      %698 = vmatpush.msra.mxu0 0.0
      %699 = vmatpush.msra.mxu0 %v474
      %700 = vmatmul.f32.gmra.mxu0 %v476
      %v701 = vpop.f32.mrf.mxu0
      %v702 = vadd.f32 0.0, %v701
      %703 = vmatmul.f32.gmra.mxu0 %v479
      %v704 = vpop.f32.mrf.mxu0
      %v705 = vadd.f32 0.0, %v704
      %706 = vmatmul.f32.gmra.mxu0 %v482
      %v707 = vpop.f32.mrf.mxu0
      %v708 = vadd.f32 0.0, %v707
      %709 = vmatmul.f32.gmra.mxu0 %v485
      %v710 = vpop.f32.mrf.mxu0
      %v711 = vadd.f32 0.0, %v710
      %712 = vmatmul.f32.gmra.mxu0 %v488
      %v713 = vpop.f32.mrf.mxu0
      %v714 = vadd.f32 0.0, %v713
      %715 = vmatmul.f32.gmra.mxu0 %v491
      %v716 = vpop.f32.mrf.mxu0
      %v717 = vadd.f32 0.0, %v716
      %718 = vmatmul.f32.gmra.mxu0 %v494
      %v719 = vpop.f32.mrf.mxu0
      %v720 = vadd.f32 0.0, %v719
      %721 = vmatmul.f32.gmra.mxu0 %v497
      %v722 = vpop.f32.mrf.mxu0
      %v723 = vadd.f32 0.0, %v722
      %724 = vmatmul.f32.gmra.mxu0 %v500
      %v725 = vpop.f32.mrf.mxu0
      %v726 = vadd.f32 0.0, %v725
      %727 = vmatmul.f32.gmra.mxu0 %v503
      %v728 = vpop.f32.mrf.mxu0
      %v729 = vadd.f32 0.0, %v728
      %730 = vmatmul.f32.gmra.mxu0 %v506
      %v731 = vpop.f32.mrf.mxu0
      %v732 = vadd.f32 0.0, %v731
      %733 = vmatmul.f32.gmra.mxu0 %v509
      %v734 = vpop.f32.mrf.mxu0
      %v735 = vadd.f32 0.0, %v734
      %736 = vmatmul.f32.gmra.mxu0 %v512
      %v737 = vpop.f32.mrf.mxu0
      %v738 = vadd.f32 0.0, %v737
      %739 = vmatmul.f32.gmra.mxu0 %v515
      %v740 = vpop.f32.mrf.mxu0
      %v741 = vadd.f32 0.0, %v740
      %742 = vmatmul.f32.gmra.mxu0 %v518
      %v743 = vpop.f32.mrf.mxu0
      %v744 = vadd.f32 0.0, %v743
      %745 = vmatmul.f32.gmra.mxu0 %v521
      %v746 = vpop.f32.mrf.mxu0
      %v747 = vadd.f32 0.0, %v746
      %748 = vmatmul.f32.gmra.mxu0 %v524
      %v749 = vpop.f32.mrf.mxu0
      %v750 = vadd.f32 0.0, %v749
      %751 = vmatmul.f32.gmra.mxu0 %v527
      %v752 = vpop.f32.mrf.mxu0
      %v753 = vadd.f32 0.0, %v752
      %754 = vmatmul.f32.gmra.mxu0 %v530
      %v755 = vpop.f32.mrf.mxu0
      %v756 = vadd.f32 0.0, %v755
      %757 = vmatmul.f32.gmra.mxu0 %v533
      %v758 = vpop.f32.mrf.mxu0
      %v759 = vadd.f32 0.0, %v758
      %760 = vmatmul.f32.gmra.mxu0 %v536
      %v761 = vpop.f32.mrf.mxu0
      %v762 = vadd.f32 0.0, %v761
      %763 = vmatmul.f32.gmra.mxu0 %v539
      %v764 = vpop.f32.mrf.mxu0
      %v765 = vadd.f32 0.0, %v764
      %766 = vmatmul.f32.gmra.mxu0 %v542
      %v767 = vpop.f32.mrf.mxu0
      %v768 = vadd.f32 0.0, %v767
      %769 = vmatmul.f32.gmra.mxu0 %v545
      %v770 = vpop.f32.mrf.mxu0
      %v771 = vadd.f32 0.0, %v770
      %772 = vmatmul.f32.gmra.mxu0 %v548
      %v773 = vpop.f32.mrf.mxu0
      %v774 = vadd.f32 0.0, %v773
      %775 = vmatmul.f32.gmra.mxu0 %v551
      %v776 = vpop.f32.mrf.mxu0
      %v777 = vadd.f32 0.0, %v776
      %778 = vmatmul.f32.gmra.mxu0 %v554
      %v779 = vpop.f32.mrf.mxu0
      %v780 = vadd.f32 0.0, %v779
      %781 = vmatmul.f32.gmra.mxu0 %v557
      %v782 = vpop.f32.mrf.mxu0
      %v783 = vadd.f32 0.0, %v782
      %784 = vmatmul.f32.gmra.mxu0 %v560
      %v785 = vpop.f32.mrf.mxu0
      %v786 = vadd.f32 0.0, %v785
      %787 = vmatmul.f32.gmra.mxu0 %v563
      %v788 = vpop.f32.mrf.mxu0
      %v789 = vadd.f32 0.0, %v788
      %790 = vmatmul.f32.gmra.mxu0 %v566
      %v791 = vpop.f32.mrf.mxu0
      %v792 = vadd.f32 0.0, %v791
      %793 = vmatmul.f32.gmra.mxu0 %v569
      %v794 = vpop.f32.mrf.mxu0
      %v795 = vadd.f32 0.0, %v794
      %796 = vdwg.mxu0
      %797 = vst [vmem:[#allocation2 + $0x10] sm:$0xff] %v589
      %798 = vst [vmem:[#allocation2 + $0x18] sm:$0xff] %v702
      %799 = vst [vmem:[#allocation2 + $0x30] sm:$0xff] %v592
      %800 = vst [vmem:[#allocation2 + $0x38] sm:$0xff] %v705
      %801 = vst [vmem:[#allocation2 + $0x50] sm:$0xff] %v595
      %802 = vst [vmem:[#allocation2 + $0x58] sm:$0xff] %v708
      %803 = vst [vmem:[#allocation2 + $0x70] sm:$0xff] %v598
      %804 = vst [vmem:[#allocation2 + $0x78] sm:$0xff] %v711
      %805 = vst [vmem:[#allocation2 + $0x90] sm:$0xff] %v601
      %806 = vst [vmem:[#allocation2 + $0x98] sm:$0xff] %v714
      %807 = vst [vmem:[#allocation2 + $0xb0] sm:$0xff] %v604
      %808 = vst [vmem:[#allocation2 + $0xb8] sm:$0xff] %v717
      %809 = vst [vmem:[#allocation2 + $0xd0] sm:$0xff] %v607
      %810 = vst [vmem:[#allocation2 + $0xd8] sm:$0xff] %v720
      %811 = vst [vmem:[#allocation2 + $0xf0] sm:$0xff] %v610
      %812 = vst [vmem:[#allocation2 + $0xf8] sm:$0xff] %v723
      %813 = vst [vmem:[#allocation2 + $0x110] sm:$0xff] %v613
      %814 = vst [vmem:[#allocation2 + $0x118] sm:$0xff] %v726
      %815 = vst [vmem:[#allocation2 + $0x130] sm:$0xff] %v616
      %816 = vst [vmem:[#allocation2 + $0x138] sm:$0xff] %v729
      %817 = vst [vmem:[#allocation2 + $0x150] sm:$0xff] %v619
      %818 = vst [vmem:[#allocation2 + $0x158] sm:$0xff] %v732
      %819 = vst [vmem:[#allocation2 + $0x170] sm:$0xff] %v622
      %820 = vst [vmem:[#allocation2 + $0x178] sm:$0xff] %v735
      %821 = vst [vmem:[#allocation2 + $0x190] sm:$0xff] %v625
      %822 = vst [vmem:[#allocation2 + $0x198] sm:$0xff] %v738
      %823 = vst [vmem:[#allocation2 + $0x1b0] sm:$0xff] %v628
      %824 = vst [vmem:[#allocation2 + $0x1b8] sm:$0xff] %v741
      %825 = vst [vmem:[#allocation2 + $0x1d0] sm:$0xff] %v631
      %826 = vst [vmem:[#allocation2 + $0x1d8] sm:$0xff] %v744
      %827 = vst [vmem:[#allocation2 + $0x1f0] sm:$0xff] %v634
      %828 = vst [vmem:[#allocation2 + $0x1f8] sm:$0xff] %v747
      %829 = vst [vmem:[#allocation2 + $0x210] sm:$0xff] %v637
      %830 = vst [vmem:[#allocation2 + $0x218] sm:$0xff] %v750
      %831 = vst [vmem:[#allocation2 + $0x230] sm:$0xff] %v640
      %832 = vst [vmem:[#allocation2 + $0x238] sm:$0xff] %v753
      %833 = vst [vmem:[#allocation2 + $0x250] sm:$0xff] %v643
      %834 = vst [vmem:[#allocation2 + $0x258] sm:$0xff] %v756
      %835 = vst [vmem:[#allocation2 + $0x270] sm:$0xff] %v646
      %836 = vst [vmem:[#allocation2 + $0x278] sm:$0xff] %v759
      %837 = vst [vmem:[#allocation2 + $0x290] sm:$0xff] %v649
      %838 = vst [vmem:[#allocation2 + $0x298] sm:$0xff] %v762
      %839 = vst [vmem:[#allocation2 + $0x2b0] sm:$0xff] %v652
      %840 = vst [vmem:[#allocation2 + $0x2b8] sm:$0xff] %v765
      %841 = vst [vmem:[#allocation2 + $0x2d0] sm:$0xff] %v655
      %842 = vst [vmem:[#allocation2 + $0x2d8] sm:$0xff] %v768
      %843 = vst [vmem:[#allocation2 + $0x2f0] sm:$0xff] %v658
      %844 = vst [vmem:[#allocation2 + $0x2f8] sm:$0xff] %v771
      %845 = vst [vmem:[#allocation2 + $0x310] sm:$0xff] %v661
      %846 = vst [vmem:[#allocation2 + $0x318] sm:$0xff] %v774
      %847 = vst [vmem:[#allocation2 + $0x330] sm:$0xff] %v664
      %848 = vst [vmem:[#allocation2 + $0x338] sm:$0xff] %v777
      %849 = vst [vmem:[#allocation2 + $0x350] sm:$0xff] %v667
      %850 = vst [vmem:[#allocation2 + $0x358] sm:$0xff] %v780
      %851 = vst [vmem:[#allocation2 + $0x370] sm:$0xff] %v670
      %852 = vst [vmem:[#allocation2 + $0x378] sm:$0xff] %v783
      %853 = vst [vmem:[#allocation2 + $0x390] sm:$0xff] %v673
      %854 = vst [vmem:[#allocation2 + $0x398] sm:$0xff] %v786
      %855 = vst [vmem:[#allocation2 + $0x3b0] sm:$0xff] %v676
      %856 = vst [vmem:[#allocation2 + $0x3b8] sm:$0xff] %v789
      %857 = vst [vmem:[#allocation2 + $0x3d0] sm:$0xff] %v679
      %858 = vst [vmem:[#allocation2 + $0x3d8] sm:$0xff] %v792
      %859 = vst [vmem:[#allocation2 + $0x3f0] sm:$0xff] %v682
      %860 = vst [vmem:[#allocation2 + $0x3f8] sm:$0xff] %v795
    $region17: #{tpu_custom_call.1} parent=1 // pred_fallthru
      _
    %v861 = vld [vmem:[#allocation2] sm:$0xff]
    %v862 = vld [vmem:[#allocation2 + $0x8] sm:$0xff]
    %v863 = vld [vmem:[#allocation2 + $0x10] sm:$0xff]
    %v864 = vld [vmem:[#allocation2 + $0x18] sm:$0xff]
    %v865 = vld [vmem:[#allocation2 + $0x20] sm:$0xff]
    %v866 = vld [vmem:[#allocation2 + $0x28] sm:$0xff]
    %v867 = vld [vmem:[#allocation2 + $0x30] sm:$0xff]
    %v868 = vld [vmem:[#allocation2 + $0x38] sm:$0xff]
    %v869 = vld [vmem:[#allocation2 + $0x40] sm:$0xff]
    %v870 = vld [vmem:[#allocation2 + $0x48] sm:$0xff]
    %v871 = vld [vmem:[#allocation2 + $0x50] sm:$0xff]
    %v872 = vld [vmem:[#allocation2 + $0x58] sm:$0xff]
    %v873 = vld [vmem:[#allocation2 + $0x60] sm:$0xff]
    %v874 = vld [vmem:[#allocation2 + $0x68] sm:$0xff]
    %v875 = vld [vmem:[#allocation2 + $0x70] sm:$0xff]
    %v876 = vld [vmem:[#allocation2 + $0x78] sm:$0xff]
    %v877 = vld [vmem:[#allocation2 + $0x80] sm:$0xff]
    %v878 = vld [vmem:[#allocation2 + $0x88] sm:$0xff]
    %v879 = vld [vmem:[#allocation2 + $0x90] sm:$0xff]
    %v880 = vld [vmem:[#allocation2 + $0x98] sm:$0xff]
    %v881 = vld [vmem:[#allocation2 + $0xa0] sm:$0xff]
    %v882 = vld [vmem:[#allocation2 + $0xa8] sm:$0xff]
    %v883 = vld [vmem:[#allocation2 + $0xb0] sm:$0xff]
    %v884 = vld [vmem:[#allocation2 + $0xb8] sm:$0xff]
    %v885 = vld [vmem:[#allocation2 + $0xc0] sm:$0xff]
    %v886 = vld [vmem:[#allocation2 + $0xc8] sm:$0xff]
    %v887 = vld [vmem:[#allocation2 + $0xd0] sm:$0xff]
    %v888 = vld [vmem:[#allocation2 + $0xd8] sm:$0xff]
    %v889 = vld [vmem:[#allocation2 + $0xe0] sm:$0xff]
    %v890 = vld [vmem:[#allocation2 + $0xe8] sm:$0xff]
    %v891 = vld [vmem:[#allocation2 + $0xf0] sm:$0xff]
    %v892 = vld [vmem:[#allocation2 + $0xf8] sm:$0xff]
    %v893 = vld [vmem:[#allocation2 + $0x100] sm:$0xff]
    %v894 = vld [vmem:[#allocation2 + $0x108] sm:$0xff]
    %v895 = vld [vmem:[#allocation2 + $0x110] sm:$0xff]
    %v896 = vld [vmem:[#allocation2 + $0x118] sm:$0xff]
    %v897 = vld [vmem:[#allocation2 + $0x120] sm:$0xff]
    %v898 = vld [vmem:[#allocation2 + $0x128] sm:$0xff]
    %v899 = vld [vmem:[#allocation2 + $0x130] sm:$0xff]
    %v900 = vld [vmem:[#allocation2 + $0x138] sm:$0xff]
    %v901 = vld [vmem:[#allocation2 + $0x140] sm:$0xff]
    %v902 = vld [vmem:[#allocation2 + $0x148] sm:$0xff]
    %v903 = vld [vmem:[#allocation2 + $0x150] sm:$0xff]
    %v904 = vld [vmem:[#allocation2 + $0x158] sm:$0xff]
    %v905 = vld [vmem:[#allocation2 + $0x160] sm:$0xff]
    %v906 = vld [vmem:[#allocation2 + $0x168] sm:$0xff]
    %v907 = vld [vmem:[#allocation2 + $0x170] sm:$0xff]
    %v908 = vld [vmem:[#allocation2 + $0x178] sm:$0xff]
    %v909 = vld [vmem:[#allocation2 + $0x180] sm:$0xff]
    %v910 = vld [vmem:[#allocation2 + $0x188] sm:$0xff]
    %v911 = vld [vmem:[#allocation2 + $0x190] sm:$0xff]
    %v912 = vld [vmem:[#allocation2 + $0x198] sm:$0xff]
    %v913 = vld [vmem:[#allocation2 + $0x1a0] sm:$0xff]
    %v914 = vld [vmem:[#allocation2 + $0x1a8] sm:$0xff]
    %v915 = vld [vmem:[#allocation2 + $0x1b0] sm:$0xff]
    %v916 = vld [vmem:[#allocation2 + $0x1b8] sm:$0xff]
    %v917 = vld [vmem:[#allocation2 + $0x1c0] sm:$0xff]
    %v918 = vld [vmem:[#allocation2 + $0x1c8] sm:$0xff]
    %v919 = vld [vmem:[#allocation2 + $0x1d0] sm:$0xff]
    %v920 = vld [vmem:[#allocation2 + $0x1d8] sm:$0xff]
    %v921 = vld [vmem:[#allocation2 + $0x1e0] sm:$0xff]
    %v922 = vld [vmem:[#allocation2 + $0x1e8] sm:$0xff]
    %v923 = vld [vmem:[#allocation2 + $0x1f0] sm:$0xff]
    %v924 = vld [vmem:[#allocation2 + $0x1f8] sm:$0xff]
    %v925 = vld [vmem:[#allocation2 + $0x200] sm:$0xff]
    %v926 = vld [vmem:[#allocation2 + $0x208] sm:$0xff]
    %v927 = vld [vmem:[#allocation2 + $0x210] sm:$0xff]
    %v928 = vld [vmem:[#allocation2 + $0x218] sm:$0xff]
    %v929 = vld [vmem:[#allocation2 + $0x220] sm:$0xff]
    %v930 = vld [vmem:[#allocation2 + $0x228] sm:$0xff]
    %v931 = vld [vmem:[#allocation2 + $0x230] sm:$0xff]
    %v932 = vld [vmem:[#allocation2 + $0x238] sm:$0xff]
    %v933 = vld [vmem:[#allocation2 + $0x240] sm:$0xff]
    %v934 = vld [vmem:[#allocation2 + $0x248] sm:$0xff]
    %v935 = vld [vmem:[#allocation2 + $0x250] sm:$0xff]
    %v936 = vld [vmem:[#allocation2 + $0x258] sm:$0xff]
    %v937 = vld [vmem:[#allocation2 + $0x260] sm:$0xff]
    %v938 = vld [vmem:[#allocation2 + $0x268] sm:$0xff]
    %v939 = vld [vmem:[#allocation2 + $0x270] sm:$0xff]
    %v940 = vld [vmem:[#allocation2 + $0x278] sm:$0xff]
    %v941 = vld [vmem:[#allocation2 + $0x280] sm:$0xff]
    %v942 = vld [vmem:[#allocation2 + $0x288] sm:$0xff]
    %v943 = vld [vmem:[#allocation2 + $0x290] sm:$0xff]
    %v944 = vld [vmem:[#allocation2 + $0x298] sm:$0xff]
    %v945 = vld [vmem:[#allocation2 + $0x2a0] sm:$0xff]
    %v946 = vld [vmem:[#allocation2 + $0x2a8] sm:$0xff]
    %v947 = vld [vmem:[#allocation2 + $0x2b0] sm:$0xff]
    %v948 = vld [vmem:[#allocation2 + $0x2b8] sm:$0xff]
    %v949 = vld [vmem:[#allocation2 + $0x2c0] sm:$0xff]
    %v950 = vld [vmem:[#allocation2 + $0x2c8] sm:$0xff]
    %v951 = vld [vmem:[#allocation2 + $0x2d0] sm:$0xff]
    %v952 = vld [vmem:[#allocation2 + $0x2d8] sm:$0xff]
    %v953 = vld [vmem:[#allocation2 + $0x2e0] sm:$0xff]
    %v954 = vld [vmem:[#allocation2 + $0x2e8] sm:$0xff]
    %v955 = vld [vmem:[#allocation2 + $0x2f0] sm:$0xff]
    %v956 = vld [vmem:[#allocation2 + $0x2f8] sm:$0xff]
    %v957 = vld [vmem:[#allocation2 + $0x300] sm:$0xff]
    %v958 = vld [vmem:[#allocation2 + $0x308] sm:$0xff]
    %v959 = vld [vmem:[#allocation2 + $0x310] sm:$0xff]
    %v960 = vld [vmem:[#allocation2 + $0x318] sm:$0xff]
    %v961 = vld [vmem:[#allocation2 + $0x320] sm:$0xff]
    %v962 = vld [vmem:[#allocation2 + $0x328] sm:$0xff]
    %v963 = vld [vmem:[#allocation2 + $0x330] sm:$0xff]
    %v964 = vld [vmem:[#allocation2 + $0x338] sm:$0xff]
    %v965 = vld [vmem:[#allocation2 + $0x340] sm:$0xff]
    %v966 = vld [vmem:[#allocation2 + $0x348] sm:$0xff]
    %v967 = vld [vmem:[#allocation2 + $0x350] sm:$0xff]
    %v968 = vld [vmem:[#allocation2 + $0x358] sm:$0xff]
    %v969 = vld [vmem:[#allocation2 + $0x360] sm:$0xff]
    %v970 = vld [vmem:[#allocation2 + $0x368] sm:$0xff]
    %v971 = vld [vmem:[#allocation2 + $0x370] sm:$0xff]
    %v972 = vld [vmem:[#allocation2 + $0x378] sm:$0xff]
    %v973 = vld [vmem:[#allocation2 + $0x380] sm:$0xff]
    %v974 = vld [vmem:[#allocation2 + $0x388] sm:$0xff]
    %v975 = vld [vmem:[#allocation2 + $0x390] sm:$0xff]
    %v976 = vld [vmem:[#allocation2 + $0x398] sm:$0xff]
    %v977 = vld [vmem:[#allocation2 + $0x3a0] sm:$0xff]
    %v978 = vld [vmem:[#allocation2 + $0x3a8] sm:$0xff]
    %v979 = vld [vmem:[#allocation2 + $0x3b0] sm:$0xff]
    %v980 = vld [vmem:[#allocation2 + $0x3b8] sm:$0xff]
    %v981 = vld [vmem:[#allocation2 + $0x3c0] sm:$0xff]
    %v982 = vld [vmem:[#allocation2 + $0x3c8] sm:$0xff]
    %v983 = vld [vmem:[#allocation2 + $0x3d0] sm:$0xff]
    %v984 = vld [vmem:[#allocation2 + $0x3d8] sm:$0xff]
    %v985 = vld [vmem:[#allocation2 + $0x3e0] sm:$0xff]
    %v986 = vld [vmem:[#allocation2 + $0x3e8] sm:$0xff]
    %v987 = vld [vmem:[#allocation2 + $0x3f0] sm:$0xff]
    %v988 = vld [vmem:[#allocation2 + $0x3f8] sm:$0xff]
    %v989 = vld [vmem:[%s2] sm:$0xff]
    %v990 = vld [vmem:[%s2 + $0x8] sm:$0xff]
    %v991 = vld [vmem:[%s2 + $0x10] sm:$0xff]
    %v992 = vld [vmem:[%s2 + $0x18] sm:$0xff]
    %v993 = vld [vmem:[%s2 + $0x20] sm:$0xff]
    %v994 = vld [vmem:[%s2 + $0x28] sm:$0xff]
    %v995 = vld [vmem:[%s2 + $0x30] sm:$0xff]
    %v996 = vld [vmem:[%s2 + $0x38] sm:$0xff]
    %v997 = vld [vmem:[%s2 + $0x40] sm:$0xff]
    %v998 = vld [vmem:[%s2 + $0x48] sm:$0xff]
    %v999 = vld [vmem:[%s2 + $0x50] sm:$0xff]
    %v1000 = vld [vmem:[%s2 + $0x58] sm:$0xff]
    %v1001 = vld [vmem:[%s2 + $0x60] sm:$0xff]
    %v1002 = vld [vmem:[%s2 + $0x68] sm:$0xff]
    %v1003 = vld [vmem:[%s2 + $0x70] sm:$0xff]
    %v1004 = vld [vmem:[%s2 + $0x78] sm:$0xff]
    %v1005 = vld [vmem:[%s2 + $0x80] sm:$0xff]
    %v1006 = vld [vmem:[%s2 + $0x88] sm:$0xff]
    %v1007 = vld [vmem:[%s2 + $0x90] sm:$0xff]
    %v1008 = vld [vmem:[%s2 + $0x98] sm:$0xff]
    %v1009 = vld [vmem:[%s2 + $0xa0] sm:$0xff]
    %v1010 = vld [vmem:[%s2 + $0xa8] sm:$0xff]
    %v1011 = vld [vmem:[%s2 + $0xb0] sm:$0xff]
    %v1012 = vld [vmem:[%s2 + $0xb8] sm:$0xff]
    %v1013 = vld [vmem:[%s2 + $0xc0] sm:$0xff]
    %v1014 = vld [vmem:[%s2 + $0xc8] sm:$0xff]
    %v1015 = vld [vmem:[%s2 + $0xd0] sm:$0xff]
    %v1016 = vld [vmem:[%s2 + $0xd8] sm:$0xff]
    %v1017 = vld [vmem:[%s2 + $0xe0] sm:$0xff]
    %v1018 = vld [vmem:[%s2 + $0xe8] sm:$0xff]
    %v1019 = vld [vmem:[%s2 + $0xf0] sm:$0xff]
    %v1020 = vld [vmem:[%s2 + $0xf8] sm:$0xff]
    %v1021 = vld [vmem:[%s2 + $0x100] sm:$0xff]
    %v1022 = vld [vmem:[%s2 + $0x108] sm:$0xff]
    %v1023 = vld [vmem:[%s2 + $0x110] sm:$0xff]
    %v1024 = vld [vmem:[%s2 + $0x118] sm:$0xff]
    %v1025 = vld [vmem:[%s2 + $0x120] sm:$0xff]
    %v1026 = vld [vmem:[%s2 + $0x128] sm:$0xff]
    %v1027 = vld [vmem:[%s2 + $0x130] sm:$0xff]
    %v1028 = vld [vmem:[%s2 + $0x138] sm:$0xff]
    %v1029 = vld [vmem:[%s2 + $0x140] sm:$0xff]
    %v1030 = vld [vmem:[%s2 + $0x148] sm:$0xff]
    %v1031 = vld [vmem:[%s2 + $0x150] sm:$0xff]
    %v1032 = vld [vmem:[%s2 + $0x158] sm:$0xff]
    %v1033 = vld [vmem:[%s2 + $0x160] sm:$0xff]
    %v1034 = vld [vmem:[%s2 + $0x168] sm:$0xff]
    %v1035 = vld [vmem:[%s2 + $0x170] sm:$0xff]
    %v1036 = vld [vmem:[%s2 + $0x178] sm:$0xff]
    %v1037 = vld [vmem:[%s2 + $0x180] sm:$0xff]
    %v1038 = vld [vmem:[%s2 + $0x188] sm:$0xff]
    %v1039 = vld [vmem:[%s2 + $0x190] sm:$0xff]
    %v1040 = vld [vmem:[%s2 + $0x198] sm:$0xff]
    %v1041 = vld [vmem:[%s2 + $0x1a0] sm:$0xff]
    %v1042 = vld [vmem:[%s2 + $0x1a8] sm:$0xff]
    %v1043 = vld [vmem:[%s2 + $0x1b0] sm:$0xff]
    %v1044 = vld [vmem:[%s2 + $0x1b8] sm:$0xff]
    %v1045 = vld [vmem:[%s2 + $0x1c0] sm:$0xff]
    %v1046 = vld [vmem:[%s2 + $0x1c8] sm:$0xff]
    %v1047 = vld [vmem:[%s2 + $0x1d0] sm:$0xff]
    %v1048 = vld [vmem:[%s2 + $0x1d8] sm:$0xff]
    %v1049 = vld [vmem:[%s2 + $0x1e0] sm:$0xff]
    %v1050 = vld [vmem:[%s2 + $0x1e8] sm:$0xff]
    %v1051 = vld [vmem:[%s2 + $0x1f0] sm:$0xff]
    %v1052 = vld [vmem:[%s2 + $0x1f8] sm:$0xff]
    %1054 = vset.pattern.permute.xlu0 0
    %1055 = vperm.xlu0 %1054, %v989
    %v1056 = vpop.permute.xlu0 %1055
    %1059 = vset.pattern.permute.xlu0 0
    %1060 = vperm.xlu0 %1059, %v990
    %v1061 = vpop.permute.xlu0 %1060
    %1064 = vset.pattern.permute.xlu0 0
    %1065 = vperm.xlu0 %1064, %v991
    %v1066 = vpop.permute.xlu0 %1065
    %1069 = vset.pattern.permute.xlu0 0
    %1070 = vperm.xlu0 %1069, %v992
    %v1071 = vpop.permute.xlu0 %1070
    %1074 = vset.pattern.permute.xlu0 0
    %1075 = vperm.xlu0 %1074, %v993
    %v1076 = vpop.permute.xlu0 %1075
    %1079 = vset.pattern.permute.xlu0 0
    %1080 = vperm.xlu0 %1079, %v994
    %v1081 = vpop.permute.xlu0 %1080
    %1084 = vset.pattern.permute.xlu0 0
    %1085 = vperm.xlu0 %1084, %v995
    %v1086 = vpop.permute.xlu0 %1085
    %1089 = vset.pattern.permute.xlu0 0
    %1090 = vperm.xlu0 %1089, %v996
    %v1091 = vpop.permute.xlu0 %1090
    %1094 = vset.pattern.permute.xlu0 0
    %1095 = vperm.xlu0 %1094, %v997
    %v1096 = vpop.permute.xlu0 %1095
    %1099 = vset.pattern.permute.xlu0 0
    %1100 = vperm.xlu0 %1099, %v998
    %v1101 = vpop.permute.xlu0 %1100
    %1104 = vset.pattern.permute.xlu0 0
    %1105 = vperm.xlu0 %1104, %v999
    %v1106 = vpop.permute.xlu0 %1105
    %1109 = vset.pattern.permute.xlu0 0
    %1110 = vperm.xlu0 %1109, %v1000
    %v1111 = vpop.permute.xlu0 %1110
    %1114 = vset.pattern.permute.xlu0 0
    %1115 = vperm.xlu0 %1114, %v1001
    %v1116 = vpop.permute.xlu0 %1115
    %1119 = vset.pattern.permute.xlu0 0
    %1120 = vperm.xlu0 %1119, %v1002
    %v1121 = vpop.permute.xlu0 %1120
    %1124 = vset.pattern.permute.xlu0 0
    %1125 = vperm.xlu0 %1124, %v1003
    %v1126 = vpop.permute.xlu0 %1125
    %1129 = vset.pattern.permute.xlu0 0
    %1130 = vperm.xlu0 %1129, %v1004
    %v1131 = vpop.permute.xlu0 %1130
    %1134 = vset.pattern.permute.xlu0 0
    %1135 = vperm.xlu0 %1134, %v1005
    %v1136 = vpop.permute.xlu0 %1135
    %1139 = vset.pattern.permute.xlu0 0
    %1140 = vperm.xlu0 %1139, %v1006
    %v1141 = vpop.permute.xlu0 %1140
    %1144 = vset.pattern.permute.xlu0 0
    %1145 = vperm.xlu0 %1144, %v1007
    %v1146 = vpop.permute.xlu0 %1145
    %1149 = vset.pattern.permute.xlu0 0
    %1150 = vperm.xlu0 %1149, %v1008
    %v1151 = vpop.permute.xlu0 %1150
    %1154 = vset.pattern.permute.xlu0 0
    %1155 = vperm.xlu0 %1154, %v1009
    %v1156 = vpop.permute.xlu0 %1155
    %1159 = vset.pattern.permute.xlu0 0
    %1160 = vperm.xlu0 %1159, %v1010
    %v1161 = vpop.permute.xlu0 %1160
    %1164 = vset.pattern.permute.xlu0 0
    %1165 = vperm.xlu0 %1164, %v1011
    %v1166 = vpop.permute.xlu0 %1165
    %1169 = vset.pattern.permute.xlu0 0
    %1170 = vperm.xlu0 %1169, %v1012
    %v1171 = vpop.permute.xlu0 %1170
    %1174 = vset.pattern.permute.xlu0 0
    %1175 = vperm.xlu0 %1174, %v1013
    %v1176 = vpop.permute.xlu0 %1175
    %1179 = vset.pattern.permute.xlu0 0
    %1180 = vperm.xlu0 %1179, %v1014
    %v1181 = vpop.permute.xlu0 %1180
    %1184 = vset.pattern.permute.xlu0 0
    %1185 = vperm.xlu0 %1184, %v1015
    %v1186 = vpop.permute.xlu0 %1185
    %1189 = vset.pattern.permute.xlu0 0
    %1190 = vperm.xlu0 %1189, %v1016
    %v1191 = vpop.permute.xlu0 %1190
    %1194 = vset.pattern.permute.xlu0 0
    %1195 = vperm.xlu0 %1194, %v1017
    %v1196 = vpop.permute.xlu0 %1195
    %1199 = vset.pattern.permute.xlu0 0
    %1200 = vperm.xlu0 %1199, %v1018
    %v1201 = vpop.permute.xlu0 %1200
    %1204 = vset.pattern.permute.xlu0 0
    %1205 = vperm.xlu0 %1204, %v1019
    %v1206 = vpop.permute.xlu0 %1205
    %1209 = vset.pattern.permute.xlu0 0
    %1210 = vperm.xlu0 %1209, %v1020
    %v1211 = vpop.permute.xlu0 %1210
    %1214 = vset.pattern.permute.xlu0 0
    %1215 = vperm.xlu0 %1214, %v1021
    %v1216 = vpop.permute.xlu0 %1215
    %1219 = vset.pattern.permute.xlu0 0
    %1220 = vperm.xlu0 %1219, %v1022
    %v1221 = vpop.permute.xlu0 %1220
    %1224 = vset.pattern.permute.xlu0 0
    %1225 = vperm.xlu0 %1224, %v1023
    %v1226 = vpop.permute.xlu0 %1225
    %1229 = vset.pattern.permute.xlu0 0
    %1230 = vperm.xlu0 %1229, %v1024
    %v1231 = vpop.permute.xlu0 %1230
    %1234 = vset.pattern.permute.xlu0 0
    %1235 = vperm.xlu0 %1234, %v1025
    %v1236 = vpop.permute.xlu0 %1235
    %1239 = vset.pattern.permute.xlu0 0
    %1240 = vperm.xlu0 %1239, %v1026
    %v1241 = vpop.permute.xlu0 %1240
    %1244 = vset.pattern.permute.xlu0 0
    %1245 = vperm.xlu0 %1244, %v1027
    %v1246 = vpop.permute.xlu0 %1245
    %1249 = vset.pattern.permute.xlu0 0
    %1250 = vperm.xlu0 %1249, %v1028
    %v1251 = vpop.permute.xlu0 %1250
    %1254 = vset.pattern.permute.xlu0 0
    %1255 = vperm.xlu0 %1254, %v1029
    %v1256 = vpop.permute.xlu0 %1255
    %1259 = vset.pattern.permute.xlu0 0
    %1260 = vperm.xlu0 %1259, %v1030
    %v1261 = vpop.permute.xlu0 %1260
    %1264 = vset.pattern.permute.xlu0 0
    %1265 = vperm.xlu0 %1264, %v1031
    %v1266 = vpop.permute.xlu0 %1265
    %1269 = vset.pattern.permute.xlu0 0
    %1270 = vperm.xlu0 %1269, %v1032
    %v1271 = vpop.permute.xlu0 %1270
    %1274 = vset.pattern.permute.xlu0 0
    %1275 = vperm.xlu0 %1274, %v1033
    %v1276 = vpop.permute.xlu0 %1275
    %1279 = vset.pattern.permute.xlu0 0
    %1280 = vperm.xlu0 %1279, %v1034
    %v1281 = vpop.permute.xlu0 %1280
    %1284 = vset.pattern.permute.xlu0 0
    %1285 = vperm.xlu0 %1284, %v1035
    %v1286 = vpop.permute.xlu0 %1285
    %1289 = vset.pattern.permute.xlu0 0
    %1290 = vperm.xlu0 %1289, %v1036
    %v1291 = vpop.permute.xlu0 %1290
    %1294 = vset.pattern.permute.xlu0 0
    %1295 = vperm.xlu0 %1294, %v1037
    %v1296 = vpop.permute.xlu0 %1295
    %1299 = vset.pattern.permute.xlu0 0
    %1300 = vperm.xlu0 %1299, %v1038
    %v1301 = vpop.permute.xlu0 %1300
    %1304 = vset.pattern.permute.xlu0 0
    %1305 = vperm.xlu0 %1304, %v1039
    %v1306 = vpop.permute.xlu0 %1305
    %1309 = vset.pattern.permute.xlu0 0
    %1310 = vperm.xlu0 %1309, %v1040
    %v1311 = vpop.permute.xlu0 %1310
    %1314 = vset.pattern.permute.xlu0 0
    %1315 = vperm.xlu0 %1314, %v1041
    %v1316 = vpop.permute.xlu0 %1315
    %1319 = vset.pattern.permute.xlu0 0
    %1320 = vperm.xlu0 %1319, %v1042
    %v1321 = vpop.permute.xlu0 %1320
    %1324 = vset.pattern.permute.xlu0 0
    %1325 = vperm.xlu0 %1324, %v1043
    %v1326 = vpop.permute.xlu0 %1325
    %1329 = vset.pattern.permute.xlu0 0
    %1330 = vperm.xlu0 %1329, %v1044
    %v1331 = vpop.permute.xlu0 %1330
    %1334 = vset.pattern.permute.xlu0 0
    %1335 = vperm.xlu0 %1334, %v1045
    %v1336 = vpop.permute.xlu0 %1335
    %1339 = vset.pattern.permute.xlu0 0
    %1340 = vperm.xlu0 %1339, %v1046
    %v1341 = vpop.permute.xlu0 %1340
    %1344 = vset.pattern.permute.xlu0 0
    %1345 = vperm.xlu0 %1344, %v1047
    %v1346 = vpop.permute.xlu0 %1345
    %1349 = vset.pattern.permute.xlu0 0
    %1350 = vperm.xlu0 %1349, %v1048
    %v1351 = vpop.permute.xlu0 %1350
    %1354 = vset.pattern.permute.xlu0 0
    %1355 = vperm.xlu0 %1354, %v1049
    %v1356 = vpop.permute.xlu0 %1355
    %1359 = vset.pattern.permute.xlu0 0
    %1360 = vperm.xlu0 %1359, %v1050
    %v1361 = vpop.permute.xlu0 %1360
    %1364 = vset.pattern.permute.xlu0 0
    %1365 = vperm.xlu0 %1364, %v1051
    %v1366 = vpop.permute.xlu0 %1365
    %1369 = vset.pattern.permute.xlu0 0
    %1370 = vperm.xlu0 %1369, %v1052
    %v1371 = vpop.permute.xlu0 %1370
    %v1373 = vadd.f32 %v861, %v1056
    %v1374 = vadd.f32 %v862, %v1056
    %v1375 = vadd.f32 %v863, %v1056
    %v1376 = vadd.f32 %v864, %v1056
    %v1377 = vadd.f32 %v865, %v1061
    %v1378 = vadd.f32 %v866, %v1061
    %v1379 = vadd.f32 %v867, %v1061
    %v1380 = vadd.f32 %v868, %v1061
    %v1381 = vadd.f32 %v869, %v1066
    %v1382 = vadd.f32 %v870, %v1066
    %v1383 = vadd.f32 %v871, %v1066
    %v1384 = vadd.f32 %v872, %v1066
    %v1385 = vadd.f32 %v873, %v1071
    %v1386 = vadd.f32 %v874, %v1071
    %v1387 = vadd.f32 %v875, %v1071
    %v1388 = vadd.f32 %v876, %v1071
    %v1389 = vadd.f32 %v877, %v1076
    %v1390 = vadd.f32 %v878, %v1076
    %v1391 = vadd.f32 %v879, %v1076
    %v1392 = vadd.f32 %v880, %v1076
    %v1393 = vadd.f32 %v881, %v1081
    %v1394 = vadd.f32 %v882, %v1081
    %v1395 = vadd.f32 %v883, %v1081
    %v1396 = vadd.f32 %v884, %v1081
    %v1397 = vadd.f32 %v885, %v1086
    %v1398 = vadd.f32 %v886, %v1086
    %v1399 = vadd.f32 %v887, %v1086
    %v1400 = vadd.f32 %v888, %v1086
    %v1401 = vadd.f32 %v889, %v1091
    %v1402 = vadd.f32 %v890, %v1091
    %v1403 = vadd.f32 %v891, %v1091
    %v1404 = vadd.f32 %v892, %v1091
    %v1405 = vadd.f32 %v893, %v1096
    %v1406 = vadd.f32 %v894, %v1096
    %v1407 = vadd.f32 %v895, %v1096
    %v1408 = vadd.f32 %v896, %v1096
    %v1409 = vadd.f32 %v897, %v1101
    %v1410 = vadd.f32 %v898, %v1101
    %v1411 = vadd.f32 %v899, %v1101
    %v1412 = vadd.f32 %v900, %v1101
    %v1413 = vadd.f32 %v901, %v1106
    %v1414 = vadd.f32 %v902, %v1106
    %v1415 = vadd.f32 %v903, %v1106
    %v1416 = vadd.f32 %v904, %v1106
    %v1417 = vadd.f32 %v905, %v1111
    %v1418 = vadd.f32 %v906, %v1111
    %v1419 = vadd.f32 %v907, %v1111
    %v1420 = vadd.f32 %v908, %v1111
    %v1421 = vadd.f32 %v909, %v1116
    %v1422 = vadd.f32 %v910, %v1116
    %v1423 = vadd.f32 %v911, %v1116
    %v1424 = vadd.f32 %v912, %v1116
    %v1425 = vadd.f32 %v913, %v1121
    %v1426 = vadd.f32 %v914, %v1121
    %v1427 = vadd.f32 %v915, %v1121
    %v1428 = vadd.f32 %v916, %v1121
    %v1429 = vadd.f32 %v917, %v1126
    %v1430 = vadd.f32 %v918, %v1126
    %v1431 = vadd.f32 %v919, %v1126
    %v1432 = vadd.f32 %v920, %v1126
    %v1433 = vadd.f32 %v921, %v1131
    %v1434 = vadd.f32 %v922, %v1131
    %v1435 = vadd.f32 %v923, %v1131
    %v1436 = vadd.f32 %v924, %v1131
    %v1437 = vadd.f32 %v925, %v1136
    %v1438 = vadd.f32 %v926, %v1136
    %v1439 = vadd.f32 %v927, %v1136
    %v1440 = vadd.f32 %v928, %v1136
    %v1441 = vadd.f32 %v929, %v1141
    %v1442 = vadd.f32 %v930, %v1141
    %v1443 = vadd.f32 %v931, %v1141
    %v1444 = vadd.f32 %v932, %v1141
    %v1445 = vadd.f32 %v933, %v1146
    %v1446 = vadd.f32 %v934, %v1146
    %v1447 = vadd.f32 %v935, %v1146
    %v1448 = vadd.f32 %v936, %v1146
    %v1449 = vadd.f32 %v937, %v1151
    %v1450 = vadd.f32 %v938, %v1151
    %v1451 = vadd.f32 %v939, %v1151
    %v1452 = vadd.f32 %v940, %v1151
    %v1453 = vadd.f32 %v941, %v1156
    %v1454 = vadd.f32 %v942, %v1156
    %v1455 = vadd.f32 %v943, %v1156
    %v1456 = vadd.f32 %v944, %v1156
    %v1457 = vadd.f32 %v945, %v1161
    %v1458 = vadd.f32 %v946, %v1161
    %v1459 = vadd.f32 %v947, %v1161
    %v1460 = vadd.f32 %v948, %v1161
    %v1461 = vadd.f32 %v949, %v1166
    %v1462 = vadd.f32 %v950, %v1166
    %v1463 = vadd.f32 %v951, %v1166
    %v1464 = vadd.f32 %v952, %v1166
    %v1465 = vadd.f32 %v953, %v1171
    %v1466 = vadd.f32 %v954, %v1171
    %v1467 = vadd.f32 %v955, %v1171
    %v1468 = vadd.f32 %v956, %v1171
    %v1469 = vadd.f32 %v957, %v1176
    %v1470 = vadd.f32 %v958, %v1176
    %v1471 = vadd.f32 %v959, %v1176
    %v1472 = vadd.f32 %v960, %v1176
    %v1473 = vadd.f32 %v961, %v1181
    %v1474 = vadd.f32 %v962, %v1181
    %v1475 = vadd.f32 %v963, %v1181
    %v1476 = vadd.f32 %v964, %v1181
    %v1477 = vadd.f32 %v965, %v1186
    %v1478 = vadd.f32 %v966, %v1186
    %v1479 = vadd.f32 %v967, %v1186
    %v1480 = vadd.f32 %v968, %v1186
    %v1481 = vadd.f32 %v969, %v1191
    %v1482 = vadd.f32 %v970, %v1191
    %v1483 = vadd.f32 %v971, %v1191
    %v1484 = vadd.f32 %v972, %v1191
    %v1485 = vadd.f32 %v973, %v1196
    %v1486 = vadd.f32 %v974, %v1196
    %v1487 = vadd.f32 %v975, %v1196
    %v1488 = vadd.f32 %v976, %v1196
    %v1489 = vadd.f32 %v977, %v1201
    %v1490 = vadd.f32 %v978, %v1201
    %v1491 = vadd.f32 %v979, %v1201
    %v1492 = vadd.f32 %v980, %v1201
    %v1493 = vadd.f32 %v981, %v1206
    %v1494 = vadd.f32 %v982, %v1206
    %v1495 = vadd.f32 %v983, %v1206
    %v1496 = vadd.f32 %v984, %v1206
    %v1497 = vadd.f32 %v985, %v1211
    %v1498 = vadd.f32 %v986, %v1211
    %v1499 = vadd.f32 %v987, %v1211
    %v1500 = vadd.f32 %v988, %v1211
    %v1501 = vadd.f32 %v861, %v1216
    %v1502 = vadd.f32 %v862, %v1216
    %v1503 = vadd.f32 %v863, %v1216
    %v1504 = vadd.f32 %v864, %v1216
    %v1505 = vadd.f32 %v865, %v1221
    %v1506 = vadd.f32 %v866, %v1221
    %v1507 = vadd.f32 %v867, %v1221
    %v1508 = vadd.f32 %v868, %v1221
    %v1509 = vadd.f32 %v869, %v1226
    %v1510 = vadd.f32 %v870, %v1226
    %v1511 = vadd.f32 %v871, %v1226
    %v1512 = vadd.f32 %v872, %v1226
    %v1513 = vadd.f32 %v873, %v1231
    %v1514 = vadd.f32 %v874, %v1231
    %v1515 = vadd.f32 %v875, %v1231
    %v1516 = vadd.f32 %v876, %v1231
    %v1517 = vadd.f32 %v877, %v1236
    %v1518 = vadd.f32 %v878, %v1236
    %v1519 = vadd.f32 %v879, %v1236
    %v1520 = vadd.f32 %v880, %v1236
    %v1521 = vadd.f32 %v881, %v1241
    %v1522 = vadd.f32 %v882, %v1241
    %v1523 = vadd.f32 %v883, %v1241
    %v1524 = vadd.f32 %v884, %v1241
    %v1525 = vadd.f32 %v885, %v1246
    %v1526 = vadd.f32 %v886, %v1246
    %v1527 = vadd.f32 %v887, %v1246
    %v1528 = vadd.f32 %v888, %v1246
    %v1529 = vadd.f32 %v889, %v1251
    %v1530 = vadd.f32 %v890, %v1251
    %v1531 = vadd.f32 %v891, %v1251
    %v1532 = vadd.f32 %v892, %v1251
    %v1533 = vadd.f32 %v893, %v1256
    %v1534 = vadd.f32 %v894, %v1256
    %v1535 = vadd.f32 %v895, %v1256
    %v1536 = vadd.f32 %v896, %v1256
    %v1537 = vadd.f32 %v897, %v1261
    %v1538 = vadd.f32 %v898, %v1261
    %v1539 = vadd.f32 %v899, %v1261
    %v1540 = vadd.f32 %v900, %v1261
    %v1541 = vadd.f32 %v901, %v1266
    %v1542 = vadd.f32 %v902, %v1266
    %v1543 = vadd.f32 %v903, %v1266
    %v1544 = vadd.f32 %v904, %v1266
    %v1545 = vadd.f32 %v905, %v1271
    %v1546 = vadd.f32 %v906, %v1271
    %v1547 = vadd.f32 %v907, %v1271
    %v1548 = vadd.f32 %v908, %v1271
    %v1549 = vadd.f32 %v909, %v1276
    %v1550 = vadd.f32 %v910, %v1276
    %v1551 = vadd.f32 %v911, %v1276
    %v1552 = vadd.f32 %v912, %v1276
    %v1553 = vadd.f32 %v913, %v1281
    %v1554 = vadd.f32 %v914, %v1281
    %v1555 = vadd.f32 %v915, %v1281
    %v1556 = vadd.f32 %v916, %v1281
    %v1557 = vadd.f32 %v917, %v1286
    %v1558 = vadd.f32 %v918, %v1286
    %v1559 = vadd.f32 %v919, %v1286
    %v1560 = vadd.f32 %v920, %v1286
    %v1561 = vadd.f32 %v921, %v1291
    %v1562 = vadd.f32 %v922, %v1291
    %v1563 = vadd.f32 %v923, %v1291
    %v1564 = vadd.f32 %v924, %v1291
    %v1565 = vadd.f32 %v925, %v1296
    %v1566 = vadd.f32 %v926, %v1296
    %v1567 = vadd.f32 %v927, %v1296
    %v1568 = vadd.f32 %v928, %v1296
    %v1569 = vadd.f32 %v929, %v1301
    %v1570 = vadd.f32 %v930, %v1301
    %v1571 = vadd.f32 %v931, %v1301
    %v1572 = vadd.f32 %v932, %v1301
    %v1573 = vadd.f32 %v933, %v1306
    %v1574 = vadd.f32 %v934, %v1306
    %v1575 = vadd.f32 %v935, %v1306
    %v1576 = vadd.f32 %v936, %v1306
    %v1577 = vadd.f32 %v937, %v1311
    %v1578 = vadd.f32 %v938, %v1311
    %v1579 = vadd.f32 %v939, %v1311
    %v1580 = vadd.f32 %v940, %v1311
    %v1581 = vadd.f32 %v941, %v1316
    %v1582 = vadd.f32 %v942, %v1316
    %v1583 = vadd.f32 %v943, %v1316
    %v1584 = vadd.f32 %v944, %v1316
    %v1585 = vadd.f32 %v945, %v1321
    %v1586 = vadd.f32 %v946, %v1321
    %v1587 = vadd.f32 %v947, %v1321
    %v1588 = vadd.f32 %v948, %v1321
    %v1589 = vadd.f32 %v949, %v1326
    %v1590 = vadd.f32 %v950, %v1326
    %v1591 = vadd.f32 %v951, %v1326
    %v1592 = vadd.f32 %v952, %v1326
    %v1593 = vadd.f32 %v953, %v1331
    %v1594 = vadd.f32 %v954, %v1331
    %v1595 = vadd.f32 %v955, %v1331
    %v1596 = vadd.f32 %v956, %v1331
    %v1597 = vadd.f32 %v957, %v1336
    %v1598 = vadd.f32 %v958, %v1336
    %v1599 = vadd.f32 %v959, %v1336
    %v1600 = vadd.f32 %v960, %v1336
    %v1601 = vadd.f32 %v961, %v1341
    %v1602 = vadd.f32 %v962, %v1341
    %v1603 = vadd.f32 %v963, %v1341
    %v1604 = vadd.f32 %v964, %v1341
    %v1605 = vadd.f32 %v965, %v1346
    %v1606 = vadd.f32 %v966, %v1346
    %v1607 = vadd.f32 %v967, %v1346
    %v1608 = vadd.f32 %v968, %v1346
    %v1609 = vadd.f32 %v969, %v1351
    %v1610 = vadd.f32 %v970, %v1351
    %v1611 = vadd.f32 %v971, %v1351
    %v1612 = vadd.f32 %v972, %v1351
    %v1613 = vadd.f32 %v973, %v1356
    %v1614 = vadd.f32 %v974, %v1356
    %v1615 = vadd.f32 %v975, %v1356
    %v1616 = vadd.f32 %v976, %v1356
    %v1617 = vadd.f32 %v977, %v1361
    %v1618 = vadd.f32 %v978, %v1361
    %v1619 = vadd.f32 %v979, %v1361
    %v1620 = vadd.f32 %v980, %v1361
    %v1621 = vadd.f32 %v981, %v1366
    %v1622 = vadd.f32 %v982, %v1366
    %v1623 = vadd.f32 %v983, %v1366
    %v1624 = vadd.f32 %v984, %v1366
    %v1625 = vadd.f32 %v985, %v1371
    %v1626 = vadd.f32 %v986, %v1371
    %v1627 = vadd.f32 %v987, %v1371
    %v1628 = vadd.f32 %v988, %v1371
    %1629 = vst [vmem:[#allocation3] sm:$0xff] %v1373
    %1630 = vst [vmem:[#allocation3 + $0x8] sm:$0xff] %v1374
    %1631 = vst [vmem:[#allocation3 + $0x10] sm:$0xff] %v1375
    %1632 = vst [vmem:[#allocation3 + $0x18] sm:$0xff] %v1376
    %1633 = vst [vmem:[#allocation3 + $0x20] sm:$0xff] %v1377
    %1634 = vst [vmem:[#allocation3 + $0x28] sm:$0xff] %v1378
    %1635 = vst [vmem:[#allocation3 + $0x30] sm:$0xff] %v1379
    %1636 = vst [vmem:[#allocation3 + $0x38] sm:$0xff] %v1380
    %1637 = vst [vmem:[#allocation3 + $0x40] sm:$0xff] %v1381
    %1638 = vst [vmem:[#allocation3 + $0x48] sm:$0xff] %v1382
    %1639 = vst [vmem:[#allocation3 + $0x50] sm:$0xff] %v1383
    %1640 = vst [vmem:[#allocation3 + $0x58] sm:$0xff] %v1384
    %1641 = vst [vmem:[#allocation3 + $0x60] sm:$0xff] %v1385
    %1642 = vst [vmem:[#allocation3 + $0x68] sm:$0xff] %v1386
    %1643 = vst [vmem:[#allocation3 + $0x70] sm:$0xff] %v1387
    %1644 = vst [vmem:[#allocation3 + $0x78] sm:$0xff] %v1388
    %1645 = vst [vmem:[#allocation3 + $0x80] sm:$0xff] %v1389
    %1646 = vst [vmem:[#allocation3 + $0x88] sm:$0xff] %v1390
    %1647 = vst [vmem:[#allocation3 + $0x90] sm:$0xff] %v1391
    %1648 = vst [vmem:[#allocation3 + $0x98] sm:$0xff] %v1392
    %1649 = vst [vmem:[#allocation3 + $0xa0] sm:$0xff] %v1393
    %1650 = vst [vmem:[#allocation3 + $0xa8] sm:$0xff] %v1394
    %1651 = vst [vmem:[#allocation3 + $0xb0] sm:$0xff] %v1395
    %1652 = vst [vmem:[#allocation3 + $0xb8] sm:$0xff] %v1396
    %1653 = vst [vmem:[#allocation3 + $0xc0] sm:$0xff] %v1397
    %1654 = vst [vmem:[#allocation3 + $0xc8] sm:$0xff] %v1398
    %1655 = vst [vmem:[#allocation3 + $0xd0] sm:$0xff] %v1399
    %1656 = vst [vmem:[#allocation3 + $0xd8] sm:$0xff] %v1400
    %1657 = vst [vmem:[#allocation3 + $0xe0] sm:$0xff] %v1401
    %1658 = vst [vmem:[#allocation3 + $0xe8] sm:$0xff] %v1402
    %1659 = vst [vmem:[#allocation3 + $0xf0] sm:$0xff] %v1403
    %1660 = vst [vmem:[#allocation3 + $0xf8] sm:$0xff] %v1404
    %1661 = vst [vmem:[#allocation3 + $0x100] sm:$0xff] %v1405
    %1662 = vst [vmem:[#allocation3 + $0x108] sm:$0xff] %v1406
    %1663 = vst [vmem:[#allocation3 + $0x110] sm:$0xff] %v1407
    %1664 = vst [vmem:[#allocation3 + $0x118] sm:$0xff] %v1408
    %1665 = vst [vmem:[#allocation3 + $0x120] sm:$0xff] %v1409
    %1666 = vst [vmem:[#allocation3 + $0x128] sm:$0xff] %v1410
    %1667 = vst [vmem:[#allocation3 + $0x130] sm:$0xff] %v1411
    %1668 = vst [vmem:[#allocation3 + $0x138] sm:$0xff] %v1412
    %1669 = vst [vmem:[#allocation3 + $0x140] sm:$0xff] %v1413
    %1670 = vst [vmem:[#allocation3 + $0x148] sm:$0xff] %v1414
    %1671 = vst [vmem:[#allocation3 + $0x150] sm:$0xff] %v1415
    %1672 = vst [vmem:[#allocation3 + $0x158] sm:$0xff] %v1416
    %1673 = vst [vmem:[#allocation3 + $0x160] sm:$0xff] %v1417
    %1674 = vst [vmem:[#allocation3 + $0x168] sm:$0xff] %v1418
    %1675 = vst [vmem:[#allocation3 + $0x170] sm:$0xff] %v1419
    %1676 = vst [vmem:[#allocation3 + $0x178] sm:$0xff] %v1420
    %1677 = vst [vmem:[#allocation3 + $0x180] sm:$0xff] %v1421
    %1678 = vst [vmem:[#allocation3 + $0x188] sm:$0xff] %v1422
    %1679 = vst [vmem:[#allocation3 + $0x190] sm:$0xff] %v1423
    %1680 = vst [vmem:[#allocation3 + $0x198] sm:$0xff] %v1424
    %1681 = vst [vmem:[#allocation3 + $0x1a0] sm:$0xff] %v1425
    %1682 = vst [vmem:[#allocation3 + $0x1a8] sm:$0xff] %v1426
    %1683 = vst [vmem:[#allocation3 + $0x1b0] sm:$0xff] %v1427
    %1684 = vst [vmem:[#allocation3 + $0x1b8] sm:$0xff] %v1428
    %1685 = vst [vmem:[#allocation3 + $0x1c0] sm:$0xff] %v1429
    %1686 = vst [vmem:[#allocation3 + $0x1c8] sm:$0xff] %v1430
    %1687 = vst [vmem:[#allocation3 + $0x1d0] sm:$0xff] %v1431
    %1688 = vst [vmem:[#allocation3 + $0x1d8] sm:$0xff] %v1432
    %1689 = vst [vmem:[#allocation3 + $0x1e0] sm:$0xff] %v1433
    %1690 = vst [vmem:[#allocation3 + $0x1e8] sm:$0xff] %v1434
    %1691 = vst [vmem:[#allocation3 + $0x1f0] sm:$0xff] %v1435
    %1692 = vst [vmem:[#allocation3 + $0x1f8] sm:$0xff] %v1436
    %1693 = vst [vmem:[#allocation3 + $0x200] sm:$0xff] %v1437
    %1694 = vst [vmem:[#allocation3 + $0x208] sm:$0xff] %v1438
    %1695 = vst [vmem:[#allocation3 + $0x210] sm:$0xff] %v1439
    %1696 = vst [vmem:[#allocation3 + $0x218] sm:$0xff] %v1440
    %1697 = vst [vmem:[#allocation3 + $0x220] sm:$0xff] %v1441
    %1698 = vst [vmem:[#allocation3 + $0x228] sm:$0xff] %v1442
    %1699 = vst [vmem:[#allocation3 + $0x230] sm:$0xff] %v1443
    %1700 = vst [vmem:[#allocation3 + $0x238] sm:$0xff] %v1444
    %1701 = vst [vmem:[#allocation3 + $0x240] sm:$0xff] %v1445
    %1702 = vst [vmem:[#allocation3 + $0x248] sm:$0xff] %v1446
    %1703 = vst [vmem:[#allocation3 + $0x250] sm:$0xff] %v1447
    %1704 = vst [vmem:[#allocation3 + $0x258] sm:$0xff] %v1448
    %1705 = vst [vmem:[#allocation3 + $0x260] sm:$0xff] %v1449
    %1706 = vst [vmem:[#allocation3 + $0x268] sm:$0xff] %v1450
    %1707 = vst [vmem:[#allocation3 + $0x270] sm:$0xff] %v1451
    %1708 = vst [vmem:[#allocation3 + $0x278] sm:$0xff] %v1452
    %1709 = vst [vmem:[#allocation3 + $0x280] sm:$0xff] %v1453
    %1710 = vst [vmem:[#allocation3 + $0x288] sm:$0xff] %v1454
    %1711 = vst [vmem:[#allocation3 + $0x290] sm:$0xff] %v1455
    %1712 = vst [vmem:[#allocation3 + $0x298] sm:$0xff] %v1456
    %1713 = vst [vmem:[#allocation3 + $0x2a0] sm:$0xff] %v1457
    %1714 = vst [vmem:[#allocation3 + $0x2a8] sm:$0xff] %v1458
    %1715 = vst [vmem:[#allocation3 + $0x2b0] sm:$0xff] %v1459
    %1716 = vst [vmem:[#allocation3 + $0x2b8] sm:$0xff] %v1460
    %1717 = vst [vmem:[#allocation3 + $0x2c0] sm:$0xff] %v1461
    %1718 = vst [vmem:[#allocation3 + $0x2c8] sm:$0xff] %v1462
    %1719 = vst [vmem:[#allocation3 + $0x2d0] sm:$0xff] %v1463
    %1720 = vst [vmem:[#allocation3 + $0x2d8] sm:$0xff] %v1464
    %1721 = vst [vmem:[#allocation3 + $0x2e0] sm:$0xff] %v1465
    %1722 = vst [vmem:[#allocation3 + $0x2e8] sm:$0xff] %v1466
    %1723 = vst [vmem:[#allocation3 + $0x2f0] sm:$0xff] %v1467
    %1724 = vst [vmem:[#allocation3 + $0x2f8] sm:$0xff] %v1468
    %1725 = vst [vmem:[#allocation3 + $0x300] sm:$0xff] %v1469
    %1726 = vst [vmem:[#allocation3 + $0x308] sm:$0xff] %v1470
    %1727 = vst [vmem:[#allocation3 + $0x310] sm:$0xff] %v1471
    %1728 = vst [vmem:[#allocation3 + $0x318] sm:$0xff] %v1472
    %1729 = vst [vmem:[#allocation3 + $0x320] sm:$0xff] %v1473
    %1730 = vst [vmem:[#allocation3 + $0x328] sm:$0xff] %v1474
    %1731 = vst [vmem:[#allocation3 + $0x330] sm:$0xff] %v1475
    %1732 = vst [vmem:[#allocation3 + $0x338] sm:$0xff] %v1476
    %1733 = vst [vmem:[#allocation3 + $0x340] sm:$0xff] %v1477
    %1734 = vst [vmem:[#allocation3 + $0x348] sm:$0xff] %v1478
    %1735 = vst [vmem:[#allocation3 + $0x350] sm:$0xff] %v1479
    %1736 = vst [vmem:[#allocation3 + $0x358] sm:$0xff] %v1480
    %1737 = vst [vmem:[#allocation3 + $0x360] sm:$0xff] %v1481
    %1738 = vst [vmem:[#allocation3 + $0x368] sm:$0xff] %v1482
    %1739 = vst [vmem:[#allocation3 + $0x370] sm:$0xff] %v1483
    %1740 = vst [vmem:[#allocation3 + $0x378] sm:$0xff] %v1484
    %1741 = vst [vmem:[#allocation3 + $0x380] sm:$0xff] %v1485
    %1742 = vst [vmem:[#allocation3 + $0x388] sm:$0xff] %v1486
    %1743 = vst [vmem:[#allocation3 + $0x390] sm:$0xff] %v1487
    %1744 = vst [vmem:[#allocation3 + $0x398] sm:$0xff] %v1488
    %1745 = vst [vmem:[#allocation3 + $0x3a0] sm:$0xff] %v1489
    %1746 = vst [vmem:[#allocation3 + $0x3a8] sm:$0xff] %v1490
    %1747 = vst [vmem:[#allocation3 + $0x3b0] sm:$0xff] %v1491
    %1748 = vst [vmem:[#allocation3 + $0x3b8] sm:$0xff] %v1492
    %1749 = vst [vmem:[#allocation3 + $0x3c0] sm:$0xff] %v1493
    %1750 = vst [vmem:[#allocation3 + $0x3c8] sm:$0xff] %v1494
    %1751 = vst [vmem:[#allocation3 + $0x3d0] sm:$0xff] %v1495
    %1752 = vst [vmem:[#allocation3 + $0x3d8] sm:$0xff] %v1496
    %1753 = vst [vmem:[#allocation3 + $0x3e0] sm:$0xff] %v1497
    %1754 = vst [vmem:[#allocation3 + $0x3e8] sm:$0xff] %v1498
    %1755 = vst [vmem:[#allocation3 + $0x3f0] sm:$0xff] %v1499
    %1756 = vst [vmem:[#allocation3 + $0x3f8] sm:$0xff] %v1500
    %1757 = vst [vmem:[#allocation3 + $0x400] sm:$0xff] %v1501
    %1758 = vst [vmem:[#allocation3 + $0x408] sm:$0xff] %v1502
    %1759 = vst [vmem:[#allocation3 + $0x410] sm:$0xff] %v1503
    %1760 = vst [vmem:[#allocation3 + $0x418] sm:$0xff] %v1504
    %1761 = vst [vmem:[#allocation3 + $0x420] sm:$0xff] %v1505
    %1762 = vst [vmem:[#allocation3 + $0x428] sm:$0xff] %v1506
    %1763 = vst [vmem:[#allocation3 + $0x430] sm:$0xff] %v1507
    %1764 = vst [vmem:[#allocation3 + $0x438] sm:$0xff] %v1508
    %1765 = vst [vmem:[#allocation3 + $0x440] sm:$0xff] %v1509
    %1766 = vst [vmem:[#allocation3 + $0x448] sm:$0xff] %v1510
    %1767 = vst [vmem:[#allocation3 + $0x450] sm:$0xff] %v1511
    %1768 = vst [vmem:[#allocation3 + $0x458] sm:$0xff] %v1512
    %1769 = vst [vmem:[#allocation3 + $0x460] sm:$0xff] %v1513
    %1770 = vst [vmem:[#allocation3 + $0x468] sm:$0xff] %v1514
    %1771 = vst [vmem:[#allocation3 + $0x470] sm:$0xff] %v1515
    %1772 = vst [vmem:[#allocation3 + $0x478] sm:$0xff] %v1516
    %1773 = vst [vmem:[#allocation3 + $0x480] sm:$0xff] %v1517
    %1774 = vst [vmem:[#allocation3 + $0x488] sm:$0xff] %v1518
    %1775 = vst [vmem:[#allocation3 + $0x490] sm:$0xff] %v1519
    %1776 = vst [vmem:[#allocation3 + $0x498] sm:$0xff] %v1520
    %1777 = vst [vmem:[#allocation3 + $0x4a0] sm:$0xff] %v1521
    %1778 = vst [vmem:[#allocation3 + $0x4a8] sm:$0xff] %v1522
    %1779 = vst [vmem:[#allocation3 + $0x4b0] sm:$0xff] %v1523
    %1780 = vst [vmem:[#allocation3 + $0x4b8] sm:$0xff] %v1524
    %1781 = vst [vmem:[#allocation3 + $0x4c0] sm:$0xff] %v1525
    %1782 = vst [vmem:[#allocation3 + $0x4c8] sm:$0xff] %v1526
    %1783 = vst [vmem:[#allocation3 + $0x4d0] sm:$0xff] %v1527
    %1784 = vst [vmem:[#allocation3 + $0x4d8] sm:$0xff] %v1528
    %1785 = vst [vmem:[#allocation3 + $0x4e0] sm:$0xff] %v1529
    %1786 = vst [vmem:[#allocation3 + $0x4e8] sm:$0xff] %v1530
    %1787 = vst [vmem:[#allocation3 + $0x4f0] sm:$0xff] %v1531
    %1788 = vst [vmem:[#allocation3 + $0x4f8] sm:$0xff] %v1532
    %1789 = vst [vmem:[#allocation3 + $0x500] sm:$0xff] %v1533
    %1790 = vst [vmem:[#allocation3 + $0x508] sm:$0xff] %v1534
    %1791 = vst [vmem:[#allocation3 + $0x510] sm:$0xff] %v1535
    %1792 = vst [vmem:[#allocation3 + $0x518] sm:$0xff] %v1536
    %1793 = vst [vmem:[#allocation3 + $0x520] sm:$0xff] %v1537
    %1794 = vst [vmem:[#allocation3 + $0x528] sm:$0xff] %v1538
    %1795 = vst [vmem:[#allocation3 + $0x530] sm:$0xff] %v1539
    %1796 = vst [vmem:[#allocation3 + $0x538] sm:$0xff] %v1540
    %1797 = vst [vmem:[#allocation3 + $0x540] sm:$0xff] %v1541
    %1798 = vst [vmem:[#allocation3 + $0x548] sm:$0xff] %v1542
    %1799 = vst [vmem:[#allocation3 + $0x550] sm:$0xff] %v1543
    %1800 = vst [vmem:[#allocation3 + $0x558] sm:$0xff] %v1544
    %1801 = vst [vmem:[#allocation3 + $0x560] sm:$0xff] %v1545
    %1802 = vst [vmem:[#allocation3 + $0x568] sm:$0xff] %v1546
    %1803 = vst [vmem:[#allocation3 + $0x570] sm:$0xff] %v1547
    %1804 = vst [vmem:[#allocation3 + $0x578] sm:$0xff] %v1548
    %1805 = vst [vmem:[#allocation3 + $0x580] sm:$0xff] %v1549
    %1806 = vst [vmem:[#allocation3 + $0x588] sm:$0xff] %v1550
    %1807 = vst [vmem:[#allocation3 + $0x590] sm:$0xff] %v1551
    %1808 = vst [vmem:[#allocation3 + $0x598] sm:$0xff] %v1552
    %1809 = vst [vmem:[#allocation3 + $0x5a0] sm:$0xff] %v1553
    %1810 = vst [vmem:[#allocation3 + $0x5a8] sm:$0xff] %v1554
    %1811 = vst [vmem:[#allocation3 + $0x5b0] sm:$0xff] %v1555
    %1812 = vst [vmem:[#allocation3 + $0x5b8] sm:$0xff] %v1556
    %1813 = vst [vmem:[#allocation3 + $0x5c0] sm:$0xff] %v1557
    %1814 = vst [vmem:[#allocation3 + $0x5c8] sm:$0xff] %v1558
    %1815 = vst [vmem:[#allocation3 + $0x5d0] sm:$0xff] %v1559
    %1816 = vst [vmem:[#allocation3 + $0x5d8] sm:$0xff] %v1560
    %1817 = vst [vmem:[#allocation3 + $0x5e0] sm:$0xff] %v1561
    %1818 = vst [vmem:[#allocation3 + $0x5e8] sm:$0xff] %v1562
    %1819 = vst [vmem:[#allocation3 + $0x5f0] sm:$0xff] %v1563
    %1820 = vst [vmem:[#allocation3 + $0x5f8] sm:$0xff] %v1564
    %1821 = vst [vmem:[#allocation3 + $0x600] sm:$0xff] %v1565
    %1822 = vst [vmem:[#allocation3 + $0x608] sm:$0xff] %v1566
    %1823 = vst [vmem:[#allocation3 + $0x610] sm:$0xff] %v1567
    %1824 = vst [vmem:[#allocation3 + $0x618] sm:$0xff] %v1568
    %1825 = vst [vmem:[#allocation3 + $0x620] sm:$0xff] %v1569
    %1826 = vst [vmem:[#allocation3 + $0x628] sm:$0xff] %v1570
    %1827 = vst [vmem:[#allocation3 + $0x630] sm:$0xff] %v1571
    %1828 = vst [vmem:[#allocation3 + $0x638] sm:$0xff] %v1572
    %1829 = vst [vmem:[#allocation3 + $0x640] sm:$0xff] %v1573
    %1830 = vst [vmem:[#allocation3 + $0x648] sm:$0xff] %v1574
    %1831 = vst [vmem:[#allocation3 + $0x650] sm:$0xff] %v1575
    %1832 = vst [vmem:[#allocation3 + $0x658] sm:$0xff] %v1576
    %1833 = vst [vmem:[#allocation3 + $0x660] sm:$0xff] %v1577
    %1834 = vst [vmem:[#allocation3 + $0x668] sm:$0xff] %v1578
    %1835 = vst [vmem:[#allocation3 + $0x670] sm:$0xff] %v1579
    %1836 = vst [vmem:[#allocation3 + $0x678] sm:$0xff] %v1580
    %1837 = vst [vmem:[#allocation3 + $0x680] sm:$0xff] %v1581
    %1838 = vst [vmem:[#allocation3 + $0x688] sm:$0xff] %v1582
    %1839 = vst [vmem:[#allocation3 + $0x690] sm:$0xff] %v1583
    %1840 = vst [vmem:[#allocation3 + $0x698] sm:$0xff] %v1584
    %1841 = vst [vmem:[#allocation3 + $0x6a0] sm:$0xff] %v1585
    %1842 = vst [vmem:[#allocation3 + $0x6a8] sm:$0xff] %v1586
    %1843 = vst [vmem:[#allocation3 + $0x6b0] sm:$0xff] %v1587
    %1844 = vst [vmem:[#allocation3 + $0x6b8] sm:$0xff] %v1588
    %1845 = vst [vmem:[#allocation3 + $0x6c0] sm:$0xff] %v1589
    %1846 = vst [vmem:[#allocation3 + $0x6c8] sm:$0xff] %v1590
    %1847 = vst [vmem:[#allocation3 + $0x6d0] sm:$0xff] %v1591
    %1848 = vst [vmem:[#allocation3 + $0x6d8] sm:$0xff] %v1592
    %1849 = vst [vmem:[#allocation3 + $0x6e0] sm:$0xff] %v1593
    %1850 = vst [vmem:[#allocation3 + $0x6e8] sm:$0xff] %v1594
    %1851 = vst [vmem:[#allocation3 + $0x6f0] sm:$0xff] %v1595
    %1852 = vst [vmem:[#allocation3 + $0x6f8] sm:$0xff] %v1596
    %1853 = vst [vmem:[#allocation3 + $0x700] sm:$0xff] %v1597
    %1854 = vst [vmem:[#allocation3 + $0x708] sm:$0xff] %v1598
    %1855 = vst [vmem:[#allocation3 + $0x710] sm:$0xff] %v1599
    %1856 = vst [vmem:[#allocation3 + $0x718] sm:$0xff] %v1600
    %1857 = vst [vmem:[#allocation3 + $0x720] sm:$0xff] %v1601
    %1858 = vst [vmem:[#allocation3 + $0x728] sm:$0xff] %v1602
    %1859 = vst [vmem:[#allocation3 + $0x730] sm:$0xff] %v1603
    %1860 = vst [vmem:[#allocation3 + $0x738] sm:$0xff] %v1604
    %1861 = vst [vmem:[#allocation3 + $0x740] sm:$0xff] %v1605
    %1862 = vst [vmem:[#allocation3 + $0x748] sm:$0xff] %v1606
    %1863 = vst [vmem:[#allocation3 + $0x750] sm:$0xff] %v1607
    %1864 = vst [vmem:[#allocation3 + $0x758] sm:$0xff] %v1608
    %1865 = vst [vmem:[#allocation3 + $0x760] sm:$0xff] %v1609
    %1866 = vst [vmem:[#allocation3 + $0x768] sm:$0xff] %v1610
    %1867 = vst [vmem:[#allocation3 + $0x770] sm:$0xff] %v1611
    %1868 = vst [vmem:[#allocation3 + $0x778] sm:$0xff] %v1612
    %1869 = vst [vmem:[#allocation3 + $0x780] sm:$0xff] %v1613
    %1870 = vst [vmem:[#allocation3 + $0x788] sm:$0xff] %v1614
    %1871 = vst [vmem:[#allocation3 + $0x790] sm:$0xff] %v1615
    %1872 = vst [vmem:[#allocation3 + $0x798] sm:$0xff] %v1616
    %1873 = vst [vmem:[#allocation3 + $0x7a0] sm:$0xff] %v1617
    %1874 = vst [vmem:[#allocation3 + $0x7a8] sm:$0xff] %v1618
    %1875 = vst [vmem:[#allocation3 + $0x7b0] sm:$0xff] %v1619
    %1876 = vst [vmem:[#allocation3 + $0x7b8] sm:$0xff] %v1620
    %1877 = vst [vmem:[#allocation3 + $0x7c0] sm:$0xff] %v1621
    %1878 = vst [vmem:[#allocation3 + $0x7c8] sm:$0xff] %v1622
    %1879 = vst [vmem:[#allocation3 + $0x7d0] sm:$0xff] %v1623
    %1880 = vst [vmem:[#allocation3 + $0x7d8] sm:$0xff] %v1624
    %1881 = vst [vmem:[#allocation3 + $0x7e0] sm:$0xff] %v1625
    %1882 = vst [vmem:[#allocation3 + $0x7e8] sm:$0xff] %v1626
    %1883 = vst [vmem:[#allocation3 + $0x7f0] sm:$0xff] %v1627
    %1884 = vst [vmem:[#allocation3 + $0x7f8] sm:$0xff] %v1628
    // Predicated region
    $region18: #{tpu_custom_call.1} parent=1 // pred_check
      _
    $region19: #{tpu_custom_call.1} parent=1 // pred_check_branch
      %1886 = sbr.rel (0) target = $region21
    $region20: #{tpu_custom_call.1} parent=1 // pred_region
      %1888 = vsyncadd [#allocation4], 0
      %s1889 = sshll.u32 [#allocation3], 4
      %s1890 = int_to_ptr.vmem [resolvable:$true] %s1889
      %s1891 = sshll.u32 %s3, 4
      %s1892 = int_to_ptr.hbm [resolvable:$true] %s1891
      %1897 = dma.vmem_to_hbm [thread:$0]  %s1890, 32768, %s1892, [#allocation4], 512, 512, 32
    $region21: #{tpu_custom_call.1} parent=1 // pred_fallthru
      _
    // Predicated region
    $region22: #{tpu_custom_call.1} parent=1 // pred_check
      _
    $region23: #{tpu_custom_call.1} parent=1 // pred_check_branch
      %1899 = sbr.rel (0) target = $region25
    $region24: #{tpu_custom_call.1} parent=1 // pred_region
      %1901 = dma.done [#allocation4], 32768
    $region25: #{tpu_custom_call.1} parent=1 // pred_fallthru
      _
    %1902 = vsyncpa [#allocation4], 1

</llo_original>
